<compile_context>
chip_gen: v7x
topology: tpu7x:2x2x1
jax: 0.10.0
libtpu: 0.0.40
codegen_flags: <defaults>
</compile_context>

<pallas_src>
import functools

import jax
import jax.numpy as jnp
from jax.experimental import pallas as pl
from jax.experimental.pallas import tpu as pltpu


def _round_up(n, m):
    return ((n + m - 1) // m) * m


def _softplus(x):
    # Numerically stable softplus == torch.log(1 + torch.exp(x)) for all x.
    return jnp.maximum(x, 0.0) + jnp.log1p(jnp.exp(-jnp.abs(x)))


def _bayes_mlp_kernel(*refs, activations, true_dims):
    """Fused Bayes-by-Backprop MLP forward (all layers in one kernel).

    refs = (x, [mu_w, rho_w, eps_w, mu_b, rho_b, eps_b] * n_layers, out)
    Weights are stored (D_in, D_out) so the MXU matmul needs no transpose.
    """
    x_ref = refs[0]
    out_ref = refs[-1]
    p = refs[1:-1]

    h = x_ref[...]
    for i, act in enumerate(activations):
        mu_w, rho_w, eps_w, mu_b, rho_b, eps_b = p[6 * i: 6 * i + 6]

        # Reparameterized sample: theta = mu + softplus(rho) * eps   (VPU/EUP)
        w = mu_w[...] + _softplus(rho_w[...]) * eps_w[...]          # (D_in, D_out)
        b = mu_b[...] + _softplus(rho_b[...]) * eps_b[...]          # (1, D_out)

        # nn.functional.linear with pre-transposed weight: y = x @ w + b  (MXU)
        h = jnp.dot(h, w, preferred_element_type=jnp.float32) + b

        if act == "relu":
            h = jnp.maximum(h, 0.0)
        elif act == "tanh":
            h = jnp.tanh(h)
        elif act == "sigmoid":
            h = jax.nn.sigmoid(h)
        elif act == "log_softmax":
            # Mask out padded lanes so they do not contribute to the reduction.
            valid = jax.lax.broadcasted_iota(jnp.int32, h.shape, 1) < true_dims[i]
            hm = jnp.where(valid, h, -jnp.inf)
            m = jnp.max(hm, axis=1, keepdims=True)
            s = hm - m
            h = s - jnp.log(jnp.sum(jnp.exp(s), axis=1, keepdims=True))
            h = jnp.where(valid, h, 0.0)
        # "none" -> identity

    out_ref[...] = h.astype(out_ref.dtype)


# ----------------------------------------------------------------------------
# Model setup (deterministic, in-script)
# ----------------------------------------------------------------------------
MU_BIAS = (-0.03, 0.03)
MU_WEIGHTS = (-0.03, 0.03)
RHO_BIAS = (-8.0, -7.0)
RHO_WEIGHTS = (-8.0, -7.0)


def init_bayesian_nn(key, nn_input_size, layer_config):
    """Mirror BayesianLayer.__init__ uniform inits (weights stored (in, out))."""
    params = []
    in_size = nn_input_size
    for out_size in layer_config:
        key, k1, k2, k3, k4 = jax.random.split(key, 5)
        mu_w = jax.random.uniform(k1, (in_size, out_size), jnp.float32,
                                  MU_WEIGHTS[0], MU_WEIGHTS[1])
        rho_w = jax.random.uniform(k2, (in_size, out_size), jnp.float32,
                                   RHO_WEIGHTS[0], RHO_WEIGHTS[1])
        mu_b = jax.random.uniform(k3, (1, out_size), jnp.float32,
                                  MU_BIAS[0], MU_BIAS[1])
        rho_b = jax.random.uniform(k4, (1, out_size), jnp.float32,
                                   RHO_BIAS[0], RHO_BIAS[1])
        params.append((mu_w, rho_w, mu_b, rho_b))
        in_size = out_size
    return params, key


def bayesian_nn_forward(x, params, activations, key):
    """BayesianNN.forward (sample=True) fully fused into one Pallas call."""
    batch, d_in = x.shape
    n_layers = len(params)
    d_out_final = params[-1][0].shape[1]

    # Pad to TPU-friendly shapes: batch -> multiple of 8 (f32 sublanes),
    # feature dims -> multiple of 128 (lanes) so loads/stores are full-vreg.
    bp = _round_up(batch, 8)
    dims = [d_in] + [p[0].shape[1] for p in params]
    dims_p = [_round_up(d, 128) for d in dims]

    def pad2(a, r, c):
        return jnp.pad(a, ((0, r - a.shape[0]), (0, c - a.shape[1])))

    x_p = pad2(x, bp, dims_p[0])

    flat = []
    for i, (mu_w, rho_w, mu_b, rho_b) in enumerate(params):
        key, kw, kb = jax.random.split(key, 3)
        eps_w = jax.random.normal(kw, mu_w.shape, jnp.float32)
        eps_b = jax.random.normal(kb, mu_b.shape, jnp.float32)
        di, do = dims_p[i], dims_p[i + 1]
        # mu / eps padded with zeros => sampled weight/bias is exactly zero in
        # the padded region regardless of the rho padding value.
        flat += [pad2(mu_w, di, do), pad2(rho_w, di, do), pad2(eps_w, di, do),
                 pad2(mu_b, 1, do), pad2(rho_b, 1, do), pad2(eps_b, 1, do)]

    kernel = functools.partial(_bayes_mlp_kernel,
                               activations=tuple(activations),
                               true_dims=tuple(dims[1:]))
    vmem = pl.BlockSpec(memory_space=pltpu.MemorySpace.VMEM)
    out_p = pl.pallas_call(
        kernel,
        out_shape=jax.ShapeDtypeStruct((bp, dims_p[-1]), jnp.float32),
        in_specs=[vmem] * (1 + 6 * n_layers),
        out_specs=vmem,
    )(x_p, *flat)
    # TODO(synk): for large layer widths, replace the whole-array VMEM specs
    # with a tiled (grid over D_out/K) double-buffered reparam+matmul pipeline.
    return out_p[:batch, :d_out_final]


def reference_forward(x, params, activations, key):
    """Pure-JAX reference (same epsilon draw order / layout as the kernel)."""
    cur = x
    for (mu_w, rho_w, mu_b, rho_b), act in zip(params, activations):
        key, kw, kb = jax.random.split(key, 3)
        eps_w = jax.random.normal(kw, mu_w.shape, jnp.float32)
        eps_b = jax.random.normal(kb, mu_b.shape, jnp.float32)
        w = mu_w + _softplus(rho_w) * eps_w
        b = mu_b + _softplus(rho_b) * eps_b
        y = cur @ w + b
        if act == "relu":
            y = jnp.maximum(y, 0.0)
        elif act == "tanh":
            y = jnp.tanh(y)
        elif act == "sigmoid":
            y = jax.nn.sigmoid(y)
        elif act == "log_softmax":
            y = jax.nn.log_softmax(y, axis=1)
        cur = y
    return cur


if __name__ == "__main__":
    # Small shapes consistent with the MLP: input 16 -> [32, 32, 8], batch 4.
    nn_input_size = 16
    layer_config = [32, 32, 8]
    activations = ["relu", "relu", "none"]   # ActivationType.RELU, RELU, NONE
    batch = 4

    key = jax.random.PRNGKey(0)
    key, k_x = jax.random.split(key)
    x = jax.random.normal(k_x, (batch, nn_input_size), jnp.float32)

    params, key = init_bayesian_nn(key, nn_input_size, layer_config)
    key, k_fwd = jax.random.split(key)

    out = bayesian_nn_forward(x, params, activations, k_fwd)
    out = jax.block_until_ready(out)

    ref = reference_forward(x, params, activations, k_fwd)
    assert out.shape == (batch, layer_config[-1])
    assert jnp.allclose(out, ref, atol=1e-5, rtol=1e-5), "mismatch vs JAX reference"

    print("KERNEL_OK")
</pallas_src>

<mosaic_0001>
module attributes {stable_mosaic.version = 11 : i64} {
  func.func @_bayes_mlp_kernel(%arg0: memref<8x128xf32, #tpu.memory_space<vmem>>, %arg1: memref<128x128xf32, #tpu.memory_space<vmem>>, %arg2: memref<128x128xf32, #tpu.memory_space<vmem>>, %arg3: memref<128x128xf32, #tpu.memory_space<vmem>>, %arg4: memref<1x128xf32, #tpu.memory_space<vmem>>, %arg5: memref<1x128xf32, #tpu.memory_space<vmem>>, %arg6: memref<1x128xf32, #tpu.memory_space<vmem>>, %arg7: memref<128x128xf32, #tpu.memory_space<vmem>>, %arg8: memref<128x128xf32, #tpu.memory_space<vmem>>, %arg9: memref<128x128xf32, #tpu.memory_space<vmem>>, %arg10: memref<1x128xf32, #tpu.memory_space<vmem>>, %arg11: memref<1x128xf32, #tpu.memory_space<vmem>>, %arg12: memref<1x128xf32, #tpu.memory_space<vmem>>, %arg13: memref<128x128xf32, #tpu.memory_space<vmem>>, %arg14: memref<128x128xf32, #tpu.memory_space<vmem>>, %arg15: memref<128x128xf32, #tpu.memory_space<vmem>>, %arg16: memref<1x128xf32, #tpu.memory_space<vmem>>, %arg17: memref<1x128xf32, #tpu.memory_space<vmem>>, %arg18: memref<1x128xf32, #tpu.memory_space<vmem>>, %arg19: memref<8x128xf32, #tpu.memory_space<vmem>>) attributes {dimension_semantics = [], scalar_prefetch = 0 : i64, scratch_operands = 0 : i64, tpu.core_type = #tpu.core_type<tc>} {
    %c0 = arith.constant 0 : index
    %c0_0 = arith.constant 0 : index
    %0 = vector.load %arg0[%c0, %c0_0] : memref<8x128xf32, #tpu.memory_space<vmem>>, vector<8x128xf32>
    %c0_1 = arith.constant 0 : index
    %c0_2 = arith.constant 0 : index
    %1 = vector.load %arg1[%c0_1, %c0_2] : memref<128x128xf32, #tpu.memory_space<vmem>>, vector<128x128xf32>
    %c0_3 = arith.constant 0 : index
    %c0_4 = arith.constant 0 : index
    %2 = vector.load %arg2[%c0_3, %c0_4] : memref<128x128xf32, #tpu.memory_space<vmem>>, vector<128x128xf32>
    %cst = arith.constant 0.000000e+00 : f32
    %3 = vector.broadcast %cst : f32 to vector<128x128xf32>
    %4 = arith.maximumf %2, %3 : vector<128x128xf32>
    %5 = math.absf %2 : vector<128x128xf32>
    %cst_5 = arith.constant 0.000000e+00 : f32
    %6 = vector.broadcast %cst_5 : f32 to vector<128x128xf32>
    %7 = arith.subf %6, %5 : vector<128x128xf32>
    %8 = math.exp %7 : vector<128x128xf32>
    %9 = math.log1p %8 : vector<128x128xf32>
    %10 = arith.addf %4, %9 : vector<128x128xf32>
    %c0_6 = arith.constant 0 : index
    %c0_7 = arith.constant 0 : index
    %11 = vector.load %arg3[%c0_6, %c0_7] : memref<128x128xf32, #tpu.memory_space<vmem>>, vector<128x128xf32>
    %12 = arith.mulf %10, %11 : vector<128x128xf32>
    %13 = arith.addf %1, %12 : vector<128x128xf32>
    %c0_8 = arith.constant 0 : index
    %c0_9 = arith.constant 0 : index
    %14 = vector.load %arg4[%c0_8, %c0_9] : memref<1x128xf32, #tpu.memory_space<vmem>>, vector<1x128xf32>
    %c0_10 = arith.constant 0 : index
    %c0_11 = arith.constant 0 : index
    %15 = vector.load %arg5[%c0_10, %c0_11] : memref<1x128xf32, #tpu.memory_space<vmem>>, vector<1x128xf32>
    %cst_12 = arith.constant 0.000000e+00 : f32
    %16 = vector.broadcast %cst_12 : f32 to vector<1x128xf32>
    %17 = arith.maximumf %15, %16 : vector<1x128xf32>
    %18 = math.absf %15 : vector<1x128xf32>
    %cst_13 = arith.constant 0.000000e+00 : f32
    %19 = vector.broadcast %cst_13 : f32 to vector<1x128xf32>
    %20 = arith.subf %19, %18 : vector<1x128xf32>
    %21 = math.exp %20 : vector<1x128xf32>
    %22 = math.log1p %21 : vector<1x128xf32>
    %23 = arith.addf %17, %22 : vector<1x128xf32>
    %c0_14 = arith.constant 0 : index
    %c0_15 = arith.constant 0 : index
    %24 = vector.load %arg6[%c0_14, %c0_15] : memref<1x128xf32, #tpu.memory_space<vmem>>, vector<1x128xf32>
    %25 = arith.mulf %23, %24 : vector<1x128xf32>
    %26 = arith.addf %14, %25 : vector<1x128xf32>
    %cst_16 = arith.constant dense<0.000000e+00> : vector<8x128xf32>
    %27 = tpu.matmul %0, %13, %cst_16 {dimension_numbers = #tpu.dot_dimension_numbers<[1], [0], [0], [1], [0, 0, 1, 1], [], []>} : vector<8x128xf32>, vector<128x128xf32>, vector<8x128xf32> -> vector<8x128xf32>
    %28 = vector.broadcast %26 : vector<1x128xf32> to vector<8x128xf32>
    %29 = arith.addf %27, %28 : vector<8x128xf32>
    %cst_17 = arith.constant 0.000000e+00 : f32
    %30 = vector.broadcast %cst_17 : f32 to vector<8x128xf32>
    %31 = arith.maximumf %29, %30 : vector<8x128xf32>
    %c0_18 = arith.constant 0 : index
    %c0_19 = arith.constant 0 : index
    %32 = vector.load %arg7[%c0_18, %c0_19] : memref<128x128xf32, #tpu.memory_space<vmem>>, vector<128x128xf32>
    %c0_20 = arith.constant 0 : index
    %c0_21 = arith.constant 0 : index
    %33 = vector.load %arg8[%c0_20, %c0_21] : memref<128x128xf32, #tpu.memory_space<vmem>>, vector<128x128xf32>
    %cst_22 = arith.constant 0.000000e+00 : f32
    %34 = vector.broadcast %cst_22 : f32 to vector<128x128xf32>
    %35 = arith.maximumf %33, %34 : vector<128x128xf32>
    %36 = math.absf %33 : vector<128x128xf32>
    %cst_23 = arith.constant 0.000000e+00 : f32
    %37 = vector.broadcast %cst_23 : f32 to vector<128x128xf32>
    %38 = arith.subf %37, %36 : vector<128x128xf32>
    %39 = math.exp %38 : vector<128x128xf32>
    %40 = math.log1p %39 : vector<128x128xf32>
    %41 = arith.addf %35, %40 : vector<128x128xf32>
    %c0_24 = arith.constant 0 : index
    %c0_25 = arith.constant 0 : index
    %42 = vector.load %arg9[%c0_24, %c0_25] : memref<128x128xf32, #tpu.memory_space<vmem>>, vector<128x128xf32>
    %43 = arith.mulf %41, %42 : vector<128x128xf32>
    %44 = arith.addf %32, %43 : vector<128x128xf32>
    %c0_26 = arith.constant 0 : index
    %c0_27 = arith.constant 0 : index
    %45 = vector.load %arg10[%c0_26, %c0_27] : memref<1x128xf32, #tpu.memory_space<vmem>>, vector<1x128xf32>
    %c0_28 = arith.constant 0 : index
    %c0_29 = arith.constant 0 : index
    %46 = vector.load %arg11[%c0_28, %c0_29] : memref<1x128xf32, #tpu.memory_space<vmem>>, vector<1x128xf32>
    %cst_30 = arith.constant 0.000000e+00 : f32
    %47 = vector.broadcast %cst_30 : f32 to vector<1x128xf32>
    %48 = arith.maximumf %46, %47 : vector<1x128xf32>
    %49 = math.absf %46 : vector<1x128xf32>
    %cst_31 = arith.constant 0.000000e+00 : f32
    %50 = vector.broadcast %cst_31 : f32 to vector<1x128xf32>
    %51 = arith.subf %50, %49 : vector<1x128xf32>
    %52 = math.exp %51 : vector<1x128xf32>
    %53 = math.log1p %52 : vector<1x128xf32>
    %54 = arith.addf %48, %53 : vector<1x128xf32>
    %c0_32 = arith.constant 0 : index
    %c0_33 = arith.constant 0 : index
    %55 = vector.load %arg12[%c0_32, %c0_33] : memref<1x128xf32, #tpu.memory_space<vmem>>, vector<1x128xf32>
    %56 = arith.mulf %54, %55 : vector<1x128xf32>
    %57 = arith.addf %45, %56 : vector<1x128xf32>
    %cst_34 = arith.constant dense<0.000000e+00> : vector<8x128xf32>
    %58 = tpu.matmul %31, %44, %cst_34 {dimension_numbers = #tpu.dot_dimension_numbers<[1], [0], [0], [1], [0, 0, 1, 1], [], []>} : vector<8x128xf32>, vector<128x128xf32>, vector<8x128xf32> -> vector<8x128xf32>
    %59 = vector.broadcast %57 : vector<1x128xf32> to vector<8x128xf32>
    %60 = arith.addf %58, %59 : vector<8x128xf32>
    %cst_35 = arith.constant 0.000000e+00 : f32
    %61 = vector.broadcast %cst_35 : f32 to vector<8x128xf32>
    %62 = arith.maximumf %60, %61 : vector<8x128xf32>
    %c0_36 = arith.constant 0 : index
    %c0_37 = arith.constant 0 : index
    %63 = vector.load %arg13[%c0_36, %c0_37] : memref<128x128xf32, #tpu.memory_space<vmem>>, vector<128x128xf32>
    %c0_38 = arith.constant 0 : index
    %c0_39 = arith.constant 0 : index
    %64 = vector.load %arg14[%c0_38, %c0_39] : memref<128x128xf32, #tpu.memory_space<vmem>>, vector<128x128xf32>
    %cst_40 = arith.constant 0.000000e+00 : f32
    %65 = vector.broadcast %cst_40 : f32 to vector<128x128xf32>
    %66 = arith.maximumf %64, %65 : vector<128x128xf32>
    %67 = math.absf %64 : vector<128x128xf32>
    %cst_41 = arith.constant 0.000000e+00 : f32
    %68 = vector.broadcast %cst_41 : f32 to vector<128x128xf32>
    %69 = arith.subf %68, %67 : vector<128x128xf32>
    %70 = math.exp %69 : vector<128x128xf32>
    %71 = math.log1p %70 : vector<128x128xf32>
    %72 = arith.addf %66, %71 : vector<128x128xf32>
    %c0_42 = arith.constant 0 : index
    %c0_43 = arith.constant 0 : index
    %73 = vector.load %arg15[%c0_42, %c0_43] : memref<128x128xf32, #tpu.memory_space<vmem>>, vector<128x128xf32>
    %74 = arith.mulf %72, %73 : vector<128x128xf32>
    %75 = arith.addf %63, %74 : vector<128x128xf32>
    %c0_44 = arith.constant 0 : index
    %c0_45 = arith.constant 0 : index
    %76 = vector.load %arg16[%c0_44, %c0_45] : memref<1x128xf32, #tpu.memory_space<vmem>>, vector<1x128xf32>
    %c0_46 = arith.constant 0 : index
    %c0_47 = arith.constant 0 : index
    %77 = vector.load %arg17[%c0_46, %c0_47] : memref<1x128xf32, #tpu.memory_space<vmem>>, vector<1x128xf32>
    %cst_48 = arith.constant 0.000000e+00 : f32
    %78 = vector.broadcast %cst_48 : f32 to vector<1x128xf32>
    %79 = arith.maximumf %77, %78 : vector<1x128xf32>
    %80 = math.absf %77 : vector<1x128xf32>
    %cst_49 = arith.constant 0.000000e+00 : f32
    %81 = vector.broadcast %cst_49 : f32 to vector<1x128xf32>
    %82 = arith.subf %81, %80 : vector<1x128xf32>
    %83 = math.exp %82 : vector<1x128xf32>
    %84 = math.log1p %83 : vector<1x128xf32>
    %85 = arith.addf %79, %84 : vector<1x128xf32>
    %c0_50 = arith.constant 0 : index
    %c0_51 = arith.constant 0 : index
    %86 = vector.load %arg18[%c0_50, %c0_51] : memref<1x128xf32, #tpu.memory_space<vmem>>, vector<1x128xf32>
    %87 = arith.mulf %85, %86 : vector<1x128xf32>
    %88 = arith.addf %76, %87 : vector<1x128xf32>
    %cst_52 = arith.constant dense<0.000000e+00> : vector<8x128xf32>
    %89 = tpu.matmul %62, %75, %cst_52 {dimension_numbers = #tpu.dot_dimension_numbers<[1], [0], [0], [1], [0, 0, 1, 1], [], []>} : vector<8x128xf32>, vector<128x128xf32>, vector<8x128xf32> -> vector<8x128xf32>
    %90 = vector.broadcast %88 : vector<1x128xf32> to vector<8x128xf32>
    %91 = arith.addf %89, %90 : vector<8x128xf32>
    %c0_53 = arith.constant 0 : index
    %c0_54 = arith.constant 0 : index
    %92 = vector.load %arg19[%c0_53, %c0_54] : memref<8x128xf32, #tpu.memory_space<vmem>>, vector<8x128xf32>
    tpu.vector_store %arg19[%c0_53, %c0_54], %91 {strides = array<i32>} : memref<8x128xf32, #tpu.memory_space<vmem>>, vector<8x128xf32>,
    return
  }
}

</mosaic_0001>

<llo_original>
// kernel: tpu_custom_call.1
$region0: #{tpu_custom_call.1}
  #allocation0 [shape = 'u32[]', space=smem, size = 0x4, offset = 0x4, fixed_abs, tag = 'smem constant byte address 0x4 - core index']
  #allocation1 [shape = 'u32[144,128]{1,0:T(1,128)}', space=vmem, size = 0x12000, scoped, tag = 'internal scratch']
  %s0 = inlined_call_operand.hbm [shape: f32[8,128], index: 0, kind: input, shape index: {}]
  %s1 = inlined_call_operand.hbm [shape: f32[128,128], index: 1, kind: input, shape index: {}]
  %s2 = inlined_call_operand.hbm [shape: f32[128,128], index: 2, kind: input, shape index: {}]
  %s3 = inlined_call_operand.hbm [shape: f32[128,128], index: 3, kind: input, shape index: {}]
  %s4 = inlined_call_operand.vmem [shape: f32[1,128], index: 4, kind: input, shape index: {}]
  %s5 = inlined_call_operand.vmem [shape: f32[1,128], index: 5, kind: input, shape index: {}]
  %s6 = inlined_call_operand.vmem [shape: f32[1,128], index: 6, kind: input, shape index: {}]
  %s7 = inlined_call_operand.hbm [shape: f32[128,128], index: 7, kind: input, shape index: {}]
  %s8 = inlined_call_operand.hbm [shape: f32[128,128], index: 8, kind: input, shape index: {}]
  %s9 = inlined_call_operand.hbm [shape: f32[128,128], index: 9, kind: input, shape index: {}]
  %s10 = inlined_call_operand.vmem [shape: f32[1,128], index: 10, kind: input, shape index: {}]
  %s11 = inlined_call_operand.vmem [shape: f32[1,128], index: 11, kind: input, shape index: {}]
  %s12 = inlined_call_operand.vmem [shape: f32[1,128], index: 12, kind: input, shape index: {}]
  %s13 = inlined_call_operand.hbm [shape: f32[128,128], index: 13, kind: input, shape index: {}]
  %s14 = inlined_call_operand.hbm [shape: f32[128,128], index: 14, kind: input, shape index: {}]
  %s15 = inlined_call_operand.hbm [shape: f32[128,128], index: 15, kind: input, shape index: {}]
  %s16 = inlined_call_operand.vmem [shape: f32[1,128], index: 16, kind: input, shape index: {}]
  %s17 = inlined_call_operand.vmem [shape: f32[1,128], index: 17, kind: input, shape index: {}]
  %s18 = inlined_call_operand.vmem [shape: f32[1,128], index: 18, kind: input, shape index: {}]
  %s19 = inlined_call_operand.hbm [shape: f32[8,128], index: 19, kind: output, shape index: {}]
  %s20 = sld [smem:[#allocation0]]
  $region126: #{tpu_custom_call.1} parent=0
    _
  %s22 = ssub.s32 1, %s20
  %s23 = scalar_select 0, %s22, %s20
  $region1: #{tpu_custom_call.1} parent=0
    #allocation2 [shape = 'u8[4096]{0}', space=vmem, size = 0x1000, scoped, tag = 'input window, operand 0, single buffered']
    #allocation3 [shape = 's32[1]{0}', space=sflag, size = 0x4, scoped, tag = 'scoped memory for tpu_custom_call.1']
    #allocation4 [shape = 's32[1]{0}', space=sflag, size = 0x4, scoped, tag = 'scoped memory for tpu_custom_call.1']
    #allocation5 [shape = 'u8[65536]{0}', space=vmem, size = 0x10000, scoped, tag = 'input window, operand 1, single buffered']
    #allocation6 [shape = 's32[1]{0}', space=sflag, size = 0x4, scoped, tag = 'scoped memory for tpu_custom_call.1']
    #allocation7 [shape = 'u8[65536]{0}', space=vmem, size = 0x10000, scoped, tag = 'input window, operand 2, single buffered']
    #allocation8 [shape = 'u8[65536]{0}', space=vmem, size = 0x10000, scoped, tag = 'input window, operand 3, single buffered']
    #allocation9 [shape = 's32[1]{0}', space=sflag, size = 0x4, scoped, tag = 'scoped memory for tpu_custom_call.1']
    #allocation10 [shape = 'u8[65536]{0}', space=vmem, size = 0x10000, scoped, tag = 'input window, operand 7, single buffered']
    #allocation11 [shape = 'u8[65536]{0}', space=vmem, size = 0x10000, scoped, tag = 'input window, operand 8, single buffered']
    #allocation12 [shape = 's32[1]{0}', space=sflag, size = 0x4, scoped, tag = 'scoped memory for tpu_custom_call.1']
    #allocation13 [shape = 'u8[65536]{0}', space=vmem, size = 0x10000, scoped, tag = 'input window, operand 9, single buffered']
    #allocation14 [shape = 'u8[65536]{0}', space=vmem, size = 0x10000, scoped, tag = 'input window, operand 13, single buffered']
    #allocation15 [shape = 's32[1]{0}', space=sflag, size = 0x4, scoped, tag = 'scoped memory for tpu_custom_call.1']
    #allocation16 [shape = 'u8[65536]{0}', space=vmem, size = 0x10000, scoped, tag = 'input window, operand 14, single buffered']
    #allocation17 [shape = 'u8[65536]{0}', space=vmem, size = 0x10000, scoped, tag = 'input window, operand 15, single buffered']
    #allocation18 [shape = 's32[1]{0}', space=sflag, size = 0x4, scoped, tag = 'scoped memory for tpu_custom_call.1']
    #allocation19 [shape = 'u8[4096]{0}', space=vmem, size = 0x1000, scoped, tag = 'output window, operand 0, single buffered']
    %24 = vsyncpa [#allocation3], 0
    %25 = vsyncpa [#allocation6], 0
    %26 = vsyncpa [#allocation9], 0
    %27 = vsyncpa [#allocation12], 0
    %28 = vsyncpa [#allocation15], 0
    %29 = vsyncpa [#allocation18], 0
    %30 = vsyncpa [#allocation4], 0
    // Predicated region
    $region2: #{tpu_custom_call.1} parent=1 // pred_check
      _
    $region3: #{tpu_custom_call.1} parent=1 // pred_check_branch
      %32 = sbr.rel (0) target = $region5
    $region4: #{tpu_custom_call.1} parent=1 // pred_region
      %s34 = ssub.s32 128, 128
      %35 = vsyncadd [#allocation3], %s34
      %s37 = sshll.u32 [#allocation2], 4
      %s38 = int_to_ptr.vmem [resolvable:$true] %s37
      %40 = dma.hbm_to_vmem [thread:$0]  %s0, 128, %s38, [#allocation3]
    $region5: #{tpu_custom_call.1} parent=1 // pred_fallthru
      _
    // Predicated region
    $region6: #{tpu_custom_call.1} parent=1 // pred_check
      _
    $region7: #{tpu_custom_call.1} parent=1 // pred_check_branch
      %42 = sbr.rel (0) target = $region9
    $region8: #{tpu_custom_call.1} parent=1 // pred_region
      %s44 = ssub.s32 2048, 2048
      %45 = vsyncadd [#allocation6], %s44
      %s46 = sshll.u32 [#allocation5], 4
      %s47 = int_to_ptr.vmem [resolvable:$true] %s46
      %52 = dma.hbm_to_vmem [thread:$0]  %s1, 2048, %s47, [#allocation6], 128, 128, 8
    $region9: #{tpu_custom_call.1} parent=1 // pred_fallthru
      _
    // Predicated region
    $region10: #{tpu_custom_call.1} parent=1 // pred_check
      _
    $region11: #{tpu_custom_call.1} parent=1 // pred_check_branch
      %54 = sbr.rel (0) target = $region13
    $region12: #{tpu_custom_call.1} parent=1 // pred_region
      %s56 = ssub.s32 2048, 2048
      %57 = vsyncadd [#allocation6], %s56
      %s58 = sshll.u32 [#allocation7], 4
      %s59 = int_to_ptr.vmem [resolvable:$true] %s58
      %64 = dma.hbm_to_vmem [thread:$0]  %s2, 2048, %s59, [#allocation6], 128, 128, 8
    $region13: #{tpu_custom_call.1} parent=1 // pred_fallthru
      _
    // Predicated region
    $region14: #{tpu_custom_call.1} parent=1 // pred_check
      _
    $region15: #{tpu_custom_call.1} parent=1 // pred_check_branch
      %66 = sbr.rel (0) target = $region17
    $region16: #{tpu_custom_call.1} parent=1 // pred_region
      %s68 = ssub.s32 2048, 2048
      %69 = vsyncadd [#allocation9], %s68
      %s70 = sshll.u32 [#allocation8], 4
      %s71 = int_to_ptr.vmem [resolvable:$true] %s70
      %76 = dma.hbm_to_vmem [thread:$0]  %s3, 2048, %s71, [#allocation9], 128, 128, 8
    $region17: #{tpu_custom_call.1} parent=1 // pred_fallthru
      _
    // Predicated region
    $region18: #{tpu_custom_call.1} parent=1 // pred_check
      _
    $region19: #{tpu_custom_call.1} parent=1 // pred_check_branch
      %78 = sbr.rel (0) target = $region21
    $region20: #{tpu_custom_call.1} parent=1 // pred_region
      _
    $region21: #{tpu_custom_call.1} parent=1 // pred_fallthru
      _
    // Predicated region
    $region22: #{tpu_custom_call.1} parent=1 // pred_check
      _
    $region23: #{tpu_custom_call.1} parent=1 // pred_check_branch
      %80 = sbr.rel (0) target = $region25
    $region24: #{tpu_custom_call.1} parent=1 // pred_region
      _
    $region25: #{tpu_custom_call.1} parent=1 // pred_fallthru
      _
    // Predicated region
    $region26: #{tpu_custom_call.1} parent=1 // pred_check
      _
    $region27: #{tpu_custom_call.1} parent=1 // pred_check_branch
      %82 = sbr.rel (0) target = $region29
    $region28: #{tpu_custom_call.1} parent=1 // pred_region
      _
    $region29: #{tpu_custom_call.1} parent=1 // pred_fallthru
      _
    // Predicated region
    $region30: #{tpu_custom_call.1} parent=1 // pred_check
      _
    $region31: #{tpu_custom_call.1} parent=1 // pred_check_branch
      %84 = sbr.rel (0) target = $region33
    $region32: #{tpu_custom_call.1} parent=1 // pred_region
      %s86 = ssub.s32 2048, 2048
      %87 = vsyncadd [#allocation9], %s86
      %s88 = sshll.u32 [#allocation10], 4
      %s89 = int_to_ptr.vmem [resolvable:$true] %s88
      %94 = dma.hbm_to_vmem [thread:$0]  %s7, 2048, %s89, [#allocation9], 128, 128, 8
    $region33: #{tpu_custom_call.1} parent=1 // pred_fallthru
      _
    // Predicated region
    $region34: #{tpu_custom_call.1} parent=1 // pred_check
      _
    $region35: #{tpu_custom_call.1} parent=1 // pred_check_branch
      %96 = sbr.rel (0) target = $region37
    $region36: #{tpu_custom_call.1} parent=1 // pred_region
      %s98 = ssub.s32 2048, 2048
      %99 = vsyncadd [#allocation12], %s98
      %s100 = sshll.u32 [#allocation11], 4
      %s101 = int_to_ptr.vmem [resolvable:$true] %s100
      %106 = dma.hbm_to_vmem [thread:$0]  %s8, 2048, %s101, [#allocation12], 128, 128, 8
    $region37: #{tpu_custom_call.1} parent=1 // pred_fallthru
      _
    // Predicated region
    $region38: #{tpu_custom_call.1} parent=1 // pred_check
      _
    $region39: #{tpu_custom_call.1} parent=1 // pred_check_branch
      %108 = sbr.rel (0) target = $region41
    $region40: #{tpu_custom_call.1} parent=1 // pred_region
      %s110 = ssub.s32 2048, 2048
      %111 = vsyncadd [#allocation12], %s110
      %s112 = sshll.u32 [#allocation13], 4
      %s113 = int_to_ptr.vmem [resolvable:$true] %s112
      %118 = dma.hbm_to_vmem [thread:$0]  %s9, 2048, %s113, [#allocation12], 128, 128, 8
    $region41: #{tpu_custom_call.1} parent=1 // pred_fallthru
      _
    // Predicated region
    $region42: #{tpu_custom_call.1} parent=1 // pred_check
      _
    $region43: #{tpu_custom_call.1} parent=1 // pred_check_branch
      %120 = sbr.rel (0) target = $region45
    $region44: #{tpu_custom_call.1} parent=1 // pred_region
      _
    $region45: #{tpu_custom_call.1} parent=1 // pred_fallthru
      _
    // Predicated region
    $region46: #{tpu_custom_call.1} parent=1 // pred_check
      _
    $region47: #{tpu_custom_call.1} parent=1 // pred_check_branch
      %122 = sbr.rel (0) target = $region49
    $region48: #{tpu_custom_call.1} parent=1 // pred_region
      _
    $region49: #{tpu_custom_call.1} parent=1 // pred_fallthru
      _
    // Predicated region
    $region50: #{tpu_custom_call.1} parent=1 // pred_check
      _
    $region51: #{tpu_custom_call.1} parent=1 // pred_check_branch
      %124 = sbr.rel (0) target = $region53
    $region52: #{tpu_custom_call.1} parent=1 // pred_region
      _
    $region53: #{tpu_custom_call.1} parent=1 // pred_fallthru
      _
    // Predicated region
    $region54: #{tpu_custom_call.1} parent=1 // pred_check
      _
    $region55: #{tpu_custom_call.1} parent=1 // pred_check_branch
      %126 = sbr.rel (0) target = $region57
    $region56: #{tpu_custom_call.1} parent=1 // pred_region
      %s128 = ssub.s32 2048, 2048
      %129 = vsyncadd [#allocation15], %s128
      %s130 = sshll.u32 [#allocation14], 4
      %s131 = int_to_ptr.vmem [resolvable:$true] %s130
      %136 = dma.hbm_to_vmem [thread:$0]  %s13, 2048, %s131, [#allocation15], 128, 128, 8
    $region57: #{tpu_custom_call.1} parent=1 // pred_fallthru
      _
    // Predicated region
    $region58: #{tpu_custom_call.1} parent=1 // pred_check
      _
    $region59: #{tpu_custom_call.1} parent=1 // pred_check_branch
      %138 = sbr.rel (0) target = $region61
    $region60: #{tpu_custom_call.1} parent=1 // pred_region
      %s140 = ssub.s32 2048, 2048
      %141 = vsyncadd [#allocation15], %s140
      %s142 = sshll.u32 [#allocation16], 4
      %s143 = int_to_ptr.vmem [resolvable:$true] %s142
      %148 = dma.hbm_to_vmem [thread:$0]  %s14, 2048, %s143, [#allocation15], 128, 128, 8
    $region61: #{tpu_custom_call.1} parent=1 // pred_fallthru
      _
    // Predicated region
    $region62: #{tpu_custom_call.1} parent=1 // pred_check
      _
    $region63: #{tpu_custom_call.1} parent=1 // pred_check_branch
      %150 = sbr.rel (0) target = $region65
    $region64: #{tpu_custom_call.1} parent=1 // pred_region
      %s152 = ssub.s32 2048, 2048
      %153 = vsyncadd [#allocation18], %s152
      %s154 = sshll.u32 [#allocation17], 4
      %s155 = int_to_ptr.vmem [resolvable:$true] %s154
      %160 = dma.hbm_to_vmem [thread:$0]  %s15, 2048, %s155, [#allocation18], 128, 128, 8
    $region65: #{tpu_custom_call.1} parent=1 // pred_fallthru
      _
    // Predicated region
    $region66: #{tpu_custom_call.1} parent=1 // pred_check
      _
    $region67: #{tpu_custom_call.1} parent=1 // pred_check_branch
      %162 = sbr.rel (0) target = $region69
    $region68: #{tpu_custom_call.1} parent=1 // pred_region
      _
    $region69: #{tpu_custom_call.1} parent=1 // pred_fallthru
      _
    // Predicated region
    $region70: #{tpu_custom_call.1} parent=1 // pred_check
      _
    $region71: #{tpu_custom_call.1} parent=1 // pred_check_branch
      %164 = sbr.rel (0) target = $region73
    $region72: #{tpu_custom_call.1} parent=1 // pred_region
      _
    $region73: #{tpu_custom_call.1} parent=1 // pred_fallthru
      _
    // Predicated region
    $region74: #{tpu_custom_call.1} parent=1 // pred_check
      _
    $region75: #{tpu_custom_call.1} parent=1 // pred_check_branch
      %166 = sbr.rel (0) target = $region77
    $region76: #{tpu_custom_call.1} parent=1 // pred_region
      _
    $region77: #{tpu_custom_call.1} parent=1 // pred_fallthru
      _
    // Predicated region
    $region78: #{tpu_custom_call.1} parent=1 // pred_check
      _
    $region79: #{tpu_custom_call.1} parent=1 // pred_check_branch
      %168 = sbr.rel (0) target = $region81
    $region80: #{tpu_custom_call.1} parent=1 // pred_region
      %169 = dma.done [#allocation3], 128
    $region81: #{tpu_custom_call.1} parent=1 // pred_fallthru
      _
    // Predicated region
    $region82: #{tpu_custom_call.1} parent=1 // pred_check
      _
    $region83: #{tpu_custom_call.1} parent=1 // pred_check_branch
      %171 = sbr.rel (0) target = $region85
    $region84: #{tpu_custom_call.1} parent=1 // pred_region
      %172 = dma.done [#allocation6], 2048
    $region85: #{tpu_custom_call.1} parent=1 // pred_fallthru
      _
    // Predicated region
    $region86: #{tpu_custom_call.1} parent=1 // pred_check
      _
    $region87: #{tpu_custom_call.1} parent=1 // pred_check_branch
      %174 = sbr.rel (0) target = $region89
    $region88: #{tpu_custom_call.1} parent=1 // pred_region
      %175 = dma.done [#allocation6], 2048
    $region89: #{tpu_custom_call.1} parent=1 // pred_fallthru
      _
    // Predicated region
    $region90: #{tpu_custom_call.1} parent=1 // pred_check
      _
    $region91: #{tpu_custom_call.1} parent=1 // pred_check_branch
      %177 = sbr.rel (0) target = $region93
    $region92: #{tpu_custom_call.1} parent=1 // pred_region
      %178 = dma.done [#allocation9], 2048
    $region93: #{tpu_custom_call.1} parent=1 // pred_fallthru
      _
    // Predicated region
    $region94: #{tpu_custom_call.1} parent=1 // pred_check
      _
    $region95: #{tpu_custom_call.1} parent=1 // pred_check_branch
      %180 = sbr.rel (0) target = $region97
    $region96: #{tpu_custom_call.1} parent=1 // pred_region
      %181 = dma.done [#allocation9], 2048
    $region97: #{tpu_custom_call.1} parent=1 // pred_fallthru
      _
    // Predicated region
    $region98: #{tpu_custom_call.1} parent=1 // pred_check
      _
    $region99: #{tpu_custom_call.1} parent=1 // pred_check_branch
      %183 = sbr.rel (0) target = $region101
    $region100: #{tpu_custom_call.1} parent=1 // pred_region
      %184 = dma.done [#allocation12], 2048
    $region101: #{tpu_custom_call.1} parent=1 // pred_fallthru
      _
    // Predicated region
    $region102: #{tpu_custom_call.1} parent=1 // pred_check
      _
    $region103: #{tpu_custom_call.1} parent=1 // pred_check_branch
      %186 = sbr.rel (0) target = $region105
    $region104: #{tpu_custom_call.1} parent=1 // pred_region
      %187 = dma.done [#allocation12], 2048
    $region105: #{tpu_custom_call.1} parent=1 // pred_fallthru
      _
    // Predicated region
    $region106: #{tpu_custom_call.1} parent=1 // pred_check
      _
    $region107: #{tpu_custom_call.1} parent=1 // pred_check_branch
      %189 = sbr.rel (0) target = $region109
    $region108: #{tpu_custom_call.1} parent=1 // pred_region
      %190 = dma.done [#allocation15], 2048
    $region109: #{tpu_custom_call.1} parent=1 // pred_fallthru
      _
    // Predicated region
    $region110: #{tpu_custom_call.1} parent=1 // pred_check
      _
    $region111: #{tpu_custom_call.1} parent=1 // pred_check_branch
      %192 = sbr.rel (0) target = $region113
    $region112: #{tpu_custom_call.1} parent=1 // pred_region
      %193 = dma.done [#allocation15], 2048
    $region113: #{tpu_custom_call.1} parent=1 // pred_fallthru
      _
    // Predicated region
    $region114: #{tpu_custom_call.1} parent=1 // pred_check
      _
    $region115: #{tpu_custom_call.1} parent=1 // pred_check_branch
      %195 = sbr.rel (0) target = $region117
    $region116: #{tpu_custom_call.1} parent=1 // pred_region
      %196 = dma.done [#allocation18], 2048
    $region117: #{tpu_custom_call.1} parent=1 // pred_fallthru
      _
    %v197 = vld [vmem:[#allocation2] sm:$0xff]
    %v198 = vld [vmem:[#allocation5] sm:$0xff]
    %v199 = vld [vmem:[#allocation5 + $0x8] sm:$0xff]
    %v200 = vld [vmem:[#allocation5 + $0x10] sm:$0xff]
    %v201 = vld [vmem:[#allocation5 + $0x18] sm:$0xff]
    %v202 = vld [vmem:[#allocation5 + $0x20] sm:$0xff]
    %v203 = vld [vmem:[#allocation5 + $0x28] sm:$0xff]
    %v204 = vld [vmem:[#allocation5 + $0x30] sm:$0xff]
    %v205 = vld [vmem:[#allocation5 + $0x38] sm:$0xff]
    %v206 = vld [vmem:[#allocation5 + $0x40] sm:$0xff]
    %v207 = vld [vmem:[#allocation5 + $0x48] sm:$0xff]
    %v208 = vld [vmem:[#allocation5 + $0x50] sm:$0xff]
    %v209 = vld [vmem:[#allocation5 + $0x58] sm:$0xff]
    %v210 = vld [vmem:[#allocation5 + $0x60] sm:$0xff]
    %v211 = vld [vmem:[#allocation5 + $0x68] sm:$0xff]
    %v212 = vld [vmem:[#allocation5 + $0x70] sm:$0xff]
    %v213 = vld [vmem:[#allocation5 + $0x78] sm:$0xff]
    %v214 = vld [vmem:[#allocation7] sm:$0xff]
    %v215 = vld [vmem:[#allocation7 + $0x8] sm:$0xff]
    %v216 = vld [vmem:[#allocation7 + $0x10] sm:$0xff]
    %v217 = vld [vmem:[#allocation7 + $0x18] sm:$0xff]
    %v218 = vld [vmem:[#allocation7 + $0x20] sm:$0xff]
    %v219 = vld [vmem:[#allocation7 + $0x28] sm:$0xff]
    %v220 = vld [vmem:[#allocation7 + $0x30] sm:$0xff]
    %v221 = vld [vmem:[#allocation7 + $0x38] sm:$0xff]
    %v222 = vld [vmem:[#allocation7 + $0x40] sm:$0xff]
    %v223 = vld [vmem:[#allocation7 + $0x48] sm:$0xff]
    %v224 = vld [vmem:[#allocation7 + $0x50] sm:$0xff]
    %v225 = vld [vmem:[#allocation7 + $0x58] sm:$0xff]
    %v226 = vld [vmem:[#allocation7 + $0x60] sm:$0xff]
    %v227 = vld [vmem:[#allocation7 + $0x68] sm:$0xff]
    %v228 = vld [vmem:[#allocation7 + $0x70] sm:$0xff]
    %v229 = vld [vmem:[#allocation7 + $0x78] sm:$0xff]
    %v230 = vmax.f32 %v214, 0.0
    %v231 = vmax.f32 %v215, 0.0
    %v232 = vmax.f32 %v216, 0.0
    %v233 = vmax.f32 %v217, 0.0
    %v234 = vmax.f32 %v218, 0.0
    %v235 = vmax.f32 %v219, 0.0
    %v236 = vmax.f32 %v220, 0.0
    %v237 = vmax.f32 %v221, 0.0
    %v238 = vmax.f32 %v222, 0.0
    %v239 = vmax.f32 %v223, 0.0
    %v240 = vmax.f32 %v224, 0.0
    %v241 = vmax.f32 %v225, 0.0
    %v242 = vmax.f32 %v226, 0.0
    %v243 = vmax.f32 %v227, 0.0
    %v244 = vmax.f32 %v228, 0.0
    %v245 = vmax.f32 %v229, 0.0
    %v246 = vand.u32 2147483647, %v214
    %v247 = vand.u32 2147483647, %v215
    %v248 = vand.u32 2147483647, %v216
    %v249 = vand.u32 2147483647, %v217
    %v250 = vand.u32 2147483647, %v218
    %v251 = vand.u32 2147483647, %v219
    %v252 = vand.u32 2147483647, %v220
    %v253 = vand.u32 2147483647, %v221
    %v254 = vand.u32 2147483647, %v222
    %v255 = vand.u32 2147483647, %v223
    %v256 = vand.u32 2147483647, %v224
    %v257 = vand.u32 2147483647, %v225
    %v258 = vand.u32 2147483647, %v226
    %v259 = vand.u32 2147483647, %v227
    %v260 = vand.u32 2147483647, %v228
    %v261 = vand.u32 2147483647, %v229
    %v262 = vsub.f32 0.0, %v246
    %v263 = vsub.f32 0.0, %v247
    %v264 = vsub.f32 0.0, %v248
    %v265 = vsub.f32 0.0, %v249
    %v266 = vsub.f32 0.0, %v250
    %v267 = vsub.f32 0.0, %v251
    %v268 = vsub.f32 0.0, %v252
    %v269 = vsub.f32 0.0, %v253
    %v270 = vsub.f32 0.0, %v254
    %v271 = vsub.f32 0.0, %v255
    %v272 = vsub.f32 0.0, %v256
    %v273 = vsub.f32 0.0, %v257
    %v274 = vsub.f32 0.0, %v258
    %v275 = vsub.f32 0.0, %v259
    %v276 = vsub.f32 0.0, %v260
    %v277 = vsub.f32 0.0, %v261
    %v278 = vmul.f32 %v262, 1.442695
    %v279 = vpow.pop %v278
    %v280 = vmul.f32 %v263, 1.442695
    %v281 = vpow.pop %v280
    %v282 = vmul.f32 %v264, 1.442695
    %v283 = vpow.pop %v282
    %v284 = vmul.f32 %v265, 1.442695
    %v285 = vpow.pop %v284
    %v286 = vmul.f32 %v266, 1.442695
    %v287 = vpow.pop %v286
    %v288 = vmul.f32 %v267, 1.442695
    %v289 = vpow.pop %v288
    %v290 = vmul.f32 %v268, 1.442695
    %v291 = vpow.pop %v290
    %v292 = vmul.f32 %v269, 1.442695
    %v293 = vpow.pop %v292
    %v294 = vmul.f32 %v270, 1.442695
    %v295 = vpow.pop %v294
    %v296 = vmul.f32 %v271, 1.442695
    %v297 = vpow.pop %v296
    %v298 = vmul.f32 %v272, 1.442695
    %v299 = vpow.pop %v298
    %v300 = vmul.f32 %v273, 1.442695
    %v301 = vpow.pop %v300
    %v302 = vmul.f32 %v274, 1.442695
    %v303 = vpow.pop %v302
    %v304 = vmul.f32 %v275, 1.442695
    %v305 = vpow.pop %v304
    %v306 = vmul.f32 %v276, 1.442695
    %v307 = vpow.pop %v306
    %v308 = vmul.f32 %v277, 1.442695
    %v309 = vpow.pop %v308
    %v310 = vadd.f32 %v279, 1.0
    %v311 = vlog2.pop %v310
    %v312 = vmul.f32 %v311, 0.6931472
    %v313 = vmul.f32 -0.5, %v279
    %v314 = vadd.f32 %v313, 1.0
    %v315 = vmul.f32 %v314, %v279
    %v316 = vand.u32 2147483647, %v279
    %vm317 = vcmp.lt.f32.partialorder %v316, 0.0004427343
    %v318 = vsel %vm317, %v315, %v312
    %v319 = vadd.f32 %v281, 1.0
    %v320 = vlog2.pop %v319
    %v321 = vmul.f32 %v320, 0.6931472
    %v322 = vmul.f32 -0.5, %v281
    %v323 = vadd.f32 %v322, 1.0
    %v324 = vmul.f32 %v323, %v281
    %v325 = vand.u32 2147483647, %v281
    %vm326 = vcmp.lt.f32.partialorder %v325, 0.0004427343
    %v327 = vsel %vm326, %v324, %v321
    %v328 = vadd.f32 %v283, 1.0
    %v329 = vlog2.pop %v328
    %v330 = vmul.f32 %v329, 0.6931472
    %v331 = vmul.f32 -0.5, %v283
    %v332 = vadd.f32 %v331, 1.0
    %v333 = vmul.f32 %v332, %v283
    %v334 = vand.u32 2147483647, %v283
    %vm335 = vcmp.lt.f32.partialorder %v334, 0.0004427343
    %v336 = vsel %vm335, %v333, %v330
    %v337 = vadd.f32 %v285, 1.0
    %v338 = vlog2.pop %v337
    %v339 = vmul.f32 %v338, 0.6931472
    %v340 = vmul.f32 -0.5, %v285
    %v341 = vadd.f32 %v340, 1.0
    %v342 = vmul.f32 %v341, %v285
    %v343 = vand.u32 2147483647, %v285
    %vm344 = vcmp.lt.f32.partialorder %v343, 0.0004427343
    %v345 = vsel %vm344, %v342, %v339
    %v346 = vadd.f32 %v287, 1.0
    %v347 = vlog2.pop %v346
    %v348 = vmul.f32 %v347, 0.6931472
    %v349 = vmul.f32 -0.5, %v287
    %v350 = vadd.f32 %v349, 1.0
    %v351 = vmul.f32 %v350, %v287
    %v352 = vand.u32 2147483647, %v287
    %vm353 = vcmp.lt.f32.partialorder %v352, 0.0004427343
    %v354 = vsel %vm353, %v351, %v348
    %v355 = vadd.f32 %v289, 1.0
    %v356 = vlog2.pop %v355
    %v357 = vmul.f32 %v356, 0.6931472
    %v358 = vmul.f32 -0.5, %v289
    %v359 = vadd.f32 %v358, 1.0
    %v360 = vmul.f32 %v359, %v289
    %v361 = vand.u32 2147483647, %v289
    %vm362 = vcmp.lt.f32.partialorder %v361, 0.0004427343
    %v363 = vsel %vm362, %v360, %v357
    %v364 = vadd.f32 %v291, 1.0
    %v365 = vlog2.pop %v364
    %v366 = vmul.f32 %v365, 0.6931472
    %v367 = vmul.f32 -0.5, %v291
    %v368 = vadd.f32 %v367, 1.0
    %v369 = vmul.f32 %v368, %v291
    %v370 = vand.u32 2147483647, %v291
    %vm371 = vcmp.lt.f32.partialorder %v370, 0.0004427343
    %v372 = vsel %vm371, %v369, %v366
    %v373 = vadd.f32 %v293, 1.0
    %v374 = vlog2.pop %v373
    %v375 = vmul.f32 %v374, 0.6931472
    %v376 = vmul.f32 -0.5, %v293
    %v377 = vadd.f32 %v376, 1.0
    %v378 = vmul.f32 %v377, %v293
    %v379 = vand.u32 2147483647, %v293
    %vm380 = vcmp.lt.f32.partialorder %v379, 0.0004427343
    %v381 = vsel %vm380, %v378, %v375
    %v382 = vadd.f32 %v295, 1.0
    %v383 = vlog2.pop %v382
    %v384 = vmul.f32 %v383, 0.6931472
    %v385 = vmul.f32 -0.5, %v295
    %v386 = vadd.f32 %v385, 1.0
    %v387 = vmul.f32 %v386, %v295
    %v388 = vand.u32 2147483647, %v295
    %vm389 = vcmp.lt.f32.partialorder %v388, 0.0004427343
    %v390 = vsel %vm389, %v387, %v384
    %v391 = vadd.f32 %v297, 1.0
    %v392 = vlog2.pop %v391
    %v393 = vmul.f32 %v392, 0.6931472
    %v394 = vmul.f32 -0.5, %v297
    %v395 = vadd.f32 %v394, 1.0
    %v396 = vmul.f32 %v395, %v297
    %v397 = vand.u32 2147483647, %v297
    %vm398 = vcmp.lt.f32.partialorder %v397, 0.0004427343
    %v399 = vsel %vm398, %v396, %v393
    %v400 = vadd.f32 %v299, 1.0
    %v401 = vlog2.pop %v400
    %v402 = vmul.f32 %v401, 0.6931472
    %v403 = vmul.f32 -0.5, %v299
    %v404 = vadd.f32 %v403, 1.0
    %v405 = vmul.f32 %v404, %v299
    %v406 = vand.u32 2147483647, %v299
    %vm407 = vcmp.lt.f32.partialorder %v406, 0.0004427343
    %v408 = vsel %vm407, %v405, %v402
    %v409 = vadd.f32 %v301, 1.0
    %v410 = vlog2.pop %v409
    %v411 = vmul.f32 %v410, 0.6931472
    %v412 = vmul.f32 -0.5, %v301
    %v413 = vadd.f32 %v412, 1.0
    %v414 = vmul.f32 %v413, %v301
    %v415 = vand.u32 2147483647, %v301
    %vm416 = vcmp.lt.f32.partialorder %v415, 0.0004427343
    %v417 = vsel %vm416, %v414, %v411
    %v418 = vadd.f32 %v303, 1.0
    %v419 = vlog2.pop %v418
    %v420 = vmul.f32 %v419, 0.6931472
    %v421 = vmul.f32 -0.5, %v303
    %v422 = vadd.f32 %v421, 1.0
    %v423 = vmul.f32 %v422, %v303
    %v424 = vand.u32 2147483647, %v303
    %vm425 = vcmp.lt.f32.partialorder %v424, 0.0004427343
    %v426 = vsel %vm425, %v423, %v420
    %v427 = vadd.f32 %v305, 1.0
    %v428 = vlog2.pop %v427
    %v429 = vmul.f32 %v428, 0.6931472
    %v430 = vmul.f32 -0.5, %v305
    %v431 = vadd.f32 %v430, 1.0
    %v432 = vmul.f32 %v431, %v305
    %v433 = vand.u32 2147483647, %v305
    %vm434 = vcmp.lt.f32.partialorder %v433, 0.0004427343
    %v435 = vsel %vm434, %v432, %v429
    %v436 = vadd.f32 %v307, 1.0
    %v437 = vlog2.pop %v436
    %v438 = vmul.f32 %v437, 0.6931472
    %v439 = vmul.f32 -0.5, %v307
    %v440 = vadd.f32 %v439, 1.0
    %v441 = vmul.f32 %v440, %v307
    %v442 = vand.u32 2147483647, %v307
    %vm443 = vcmp.lt.f32.partialorder %v442, 0.0004427343
    %v444 = vsel %vm443, %v441, %v438
    %v445 = vadd.f32 %v309, 1.0
    %v446 = vlog2.pop %v445
    %v447 = vmul.f32 %v446, 0.6931472
    %v448 = vmul.f32 -0.5, %v309
    %v449 = vadd.f32 %v448, 1.0
    %v450 = vmul.f32 %v449, %v309
    %v451 = vand.u32 2147483647, %v309
    %vm452 = vcmp.lt.f32.partialorder %v451, 0.0004427343
    %v453 = vsel %vm452, %v450, %v447
    %v454 = vadd.f32 %v230, %v318
    %v455 = vadd.f32 %v231, %v327
    %v456 = vadd.f32 %v232, %v336
    %v457 = vadd.f32 %v233, %v345
    %v458 = vadd.f32 %v234, %v354
    %v459 = vadd.f32 %v235, %v363
    %v460 = vadd.f32 %v236, %v372
    %v461 = vadd.f32 %v237, %v381
    %v462 = vadd.f32 %v238, %v390
    %v463 = vadd.f32 %v239, %v399
    %v464 = vadd.f32 %v240, %v408
    %v465 = vadd.f32 %v241, %v417
    %v466 = vadd.f32 %v242, %v426
    %v467 = vadd.f32 %v243, %v435
    %v468 = vadd.f32 %v244, %v444
    %v469 = vadd.f32 %v245, %v453
    %v470 = vld [vmem:[#allocation8] sm:$0xff]
    %v471 = vld [vmem:[#allocation8 + $0x8] sm:$0xff]
    %v472 = vld [vmem:[#allocation8 + $0x10] sm:$0xff]
    %v473 = vld [vmem:[#allocation8 + $0x18] sm:$0xff]
    %v474 = vld [vmem:[#allocation8 + $0x20] sm:$0xff]
    %v475 = vld [vmem:[#allocation8 + $0x28] sm:$0xff]
    %v476 = vld [vmem:[#allocation8 + $0x30] sm:$0xff]
    %v477 = vld [vmem:[#allocation8 + $0x38] sm:$0xff]
    %v478 = vld [vmem:[#allocation8 + $0x40] sm:$0xff]
    %v479 = vld [vmem:[#allocation8 + $0x48] sm:$0xff]
    %v480 = vld [vmem:[#allocation8 + $0x50] sm:$0xff]
    %v481 = vld [vmem:[#allocation8 + $0x58] sm:$0xff]
    %v482 = vld [vmem:[#allocation8 + $0x60] sm:$0xff]
    %v483 = vld [vmem:[#allocation8 + $0x68] sm:$0xff]
    %v484 = vld [vmem:[#allocation8 + $0x70] sm:$0xff]
    %v485 = vld [vmem:[#allocation8 + $0x78] sm:$0xff]
    %v486 = vmul.f32 %v454, %v470
    %v487 = vmul.f32 %v455, %v471
    %v488 = vmul.f32 %v456, %v472
    %v489 = vmul.f32 %v457, %v473
    %v490 = vmul.f32 %v458, %v474
    %v491 = vmul.f32 %v459, %v475
    %v492 = vmul.f32 %v460, %v476
    %v493 = vmul.f32 %v461, %v477
    %v494 = vmul.f32 %v462, %v478
    %v495 = vmul.f32 %v463, %v479
    %v496 = vmul.f32 %v464, %v480
    %v497 = vmul.f32 %v465, %v481
    %v498 = vmul.f32 %v466, %v482
    %v499 = vmul.f32 %v467, %v483
    %v500 = vmul.f32 %v468, %v484
    %v501 = vmul.f32 %v469, %v485
    %v502 = vadd.f32 %v198, %v486
    %v503 = vadd.f32 %v199, %v487
    %v504 = vadd.f32 %v200, %v488
    %v505 = vadd.f32 %v201, %v489
    %v506 = vadd.f32 %v202, %v490
    %v507 = vadd.f32 %v203, %v491
    %v508 = vadd.f32 %v204, %v492
    %v509 = vadd.f32 %v205, %v493
    %v510 = vadd.f32 %v206, %v494
    %v511 = vadd.f32 %v207, %v495
    %v512 = vadd.f32 %v208, %v496
    %v513 = vadd.f32 %v209, %v497
    %v514 = vadd.f32 %v210, %v498
    %v515 = vadd.f32 %v211, %v499
    %v516 = vadd.f32 %v212, %v500
    %v517 = vadd.f32 %v213, %v501
    %v518 = vld [vmem:[%s4] sm:$0x1]
    %v519 = vld [vmem:[%s5] sm:$0x1]
    %v520 = vmax.f32 %v519, 0.0
    %v521 = vand.u32 2147483647, %v519
    %v522 = vsub.f32 0.0, %v521
    %v523 = vmul.f32 %v522, 1.442695
    %v524 = vpow.pop %v523
    %v525 = vadd.f32 %v524, 1.0
    %v526 = vlog2.pop %v525
    %v527 = vmul.f32 %v526, 0.6931472
    %v528 = vmul.f32 -0.5, %v524
    %v529 = vadd.f32 %v528, 1.0
    %v530 = vmul.f32 %v529, %v524
    %v531 = vand.u32 2147483647, %v524
    %vm532 = vcmp.lt.f32.partialorder %v531, 0.0004427343
    %v533 = vsel %vm532, %v530, %v527
    %v534 = vadd.f32 %v520, %v533
    %v535 = vld [vmem:[%s6] sm:$0x1]
    %v536 = vmul.f32 %v534, %v535
    %v537 = vadd.f32 %v518, %v536
    %v539 = vlaneseq
    %v540 = vshrl.u32 %v539, 7
    %v541 = vsub.s32 0, %v540
    %v542 = vrot.slane %v537, %v541
    %544 = vmatprep.subr.mxu0 0.0
    %545 = vmatpush1.msra.mxu0 %v502
    %546 = vmatprep.subr.mxu0 0.0
    %547 = vmatpush1.msra.mxu0 %v503
    %548 = vmatprep.subr.mxu0 0.0
    %549 = vmatpush1.msra.mxu0 %v504
    %550 = vmatprep.subr.mxu0 0.0
    %551 = vmatpush1.msra.mxu0 %v505
    %552 = vmatprep.subr.mxu0 0.0
    %553 = vmatpush1.msra.mxu0 %v506
    %554 = vmatprep.subr.mxu0 0.0
    %555 = vmatpush1.msra.mxu0 %v507
    %556 = vmatprep.subr.mxu0 0.0
    %557 = vmatpush1.msra.mxu0 %v508
    %558 = vmatprep.subr.mxu0 0.0
    %559 = vmatpush1.msra.mxu0 %v509
    %560 = vmatprep.subr.mxu0 0.0
    %561 = vmatpush1.msra.mxu0 %v510
    %562 = vmatprep.subr.mxu0 0.0
    %563 = vmatpush1.msra.mxu0 %v511
    %564 = vmatprep.subr.mxu0 0.0
    %565 = vmatpush1.msra.mxu0 %v512
    %566 = vmatprep.subr.mxu0 0.0
    %567 = vmatpush1.msra.mxu0 %v513
    %568 = vmatprep.subr.mxu0 0.0
    %569 = vmatpush1.msra.mxu0 %v514
    %570 = vmatprep.subr.mxu0 0.0
    %571 = vmatpush1.msra.mxu0 %v515
    %572 = vmatprep.subr.mxu0 0.0
    %573 = vmatpush1.msra.mxu0 %v516
    %574 = vmatprep.subr.mxu0 0.0
    %575 = vmatpush1.msra.mxu0 %v517
    %576 = vmatprep.subr.mxu0 0.0
    %577 = vmatpush1.msra.mxu0 0.0
    %578 = vmatprep.subr.mxu0 0.0
    %579 = vmatpush1.msra.mxu0 0.0
    %580 = vmatprep.subr.mxu0 0.0
    %581 = vmatpush1.msra.mxu0 0.0
    %582 = vmatprep.subr.mxu0 0.0
    %583 = vmatpush1.msra.mxu0 0.0
    %584 = vmatprep.subr.mxu0 0.0
    %585 = vmatpush1.msra.mxu0 0.0
    %586 = vmatprep.subr.mxu0 0.0
    %587 = vmatpush1.msra.mxu0 0.0
    %588 = vmatprep.subr.mxu0 0.0
    %589 = vmatpush1.msra.mxu0 0.0
    %590 = vmatprep.subr.mxu0 0.0
    %591 = vmatpush1.msra.mxu0 0.0
    %592 = vmatprep.subr.mxu0 0.0
    %593 = vmatpush1.msra.mxu0 0.0
    %594 = vmatprep.subr.mxu0 0.0
    %595 = vmatpush1.msra.mxu0 0.0
    %596 = vmatprep.subr.mxu0 0.0
    %597 = vmatpush1.msra.mxu0 0.0
    %598 = vmatprep.subr.mxu0 0.0
    %599 = vmatpush1.msra.mxu0 0.0
    %600 = vmatprep.subr.mxu0 0.0
    %601 = vmatpush1.msra.mxu0 0.0
    %602 = vmatprep.subr.mxu0 0.0
    %603 = vmatpush1.msra.mxu0 0.0
    %604 = vmatprep.subr.mxu0 0.0
    %605 = vmatpush1.msra.mxu0 0.0
    %606 = vmatprep.subr.mxu0 0.0
    %607 = vmatpush1.msra.mxu0 0.0
    %608 = vmatprep.mubr.f32.mxu0 0.0
    %609 = vmatmul.mubr.f32.gmra.mrb[0].mxu0 %v197
    %v610 = vpop.f32.mrb[0].mxu0
    %v611 = vadd.f32 %v542, %v610
    %v612 = vpop.f32.mrb[0].mxu0
    %613 = vdwg.mxu0
    %v614 = vmax.f32 %v611, 0.0
    %v615 = vld [vmem:[#allocation10] sm:$0xff]
    %v616 = vld [vmem:[#allocation10 + $0x8] sm:$0xff]
    %v617 = vld [vmem:[#allocation10 + $0x10] sm:$0xff]
    %v618 = vld [vmem:[#allocation10 + $0x18] sm:$0xff]
    %v619 = vld [vmem:[#allocation10 + $0x20] sm:$0xff]
    %v620 = vld [vmem:[#allocation10 + $0x28] sm:$0xff]
    %v621 = vld [vmem:[#allocation10 + $0x30] sm:$0xff]
    %v622 = vld [vmem:[#allocation10 + $0x38] sm:$0xff]
    %v623 = vld [vmem:[#allocation10 + $0x40] sm:$0xff]
    %v624 = vld [vmem:[#allocation10 + $0x48] sm:$0xff]
    %v625 = vld [vmem:[#allocation10 + $0x50] sm:$0xff]
    %v626 = vld [vmem:[#allocation10 + $0x58] sm:$0xff]
    %v627 = vld [vmem:[#allocation10 + $0x60] sm:$0xff]
    %v628 = vld [vmem:[#allocation10 + $0x68] sm:$0xff]
    %v629 = vld [vmem:[#allocation10 + $0x70] sm:$0xff]
    %v630 = vld [vmem:[#allocation10 + $0x78] sm:$0xff]
    %v631 = vld [vmem:[#allocation11] sm:$0xff]
    %v632 = vld [vmem:[#allocation11 + $0x8] sm:$0xff]
    %v633 = vld [vmem:[#allocation11 + $0x10] sm:$0xff]
    %v634 = vld [vmem:[#allocation11 + $0x18] sm:$0xff]
    %v635 = vld [vmem:[#allocation11 + $0x20] sm:$0xff]
    %v636 = vld [vmem:[#allocation11 + $0x28] sm:$0xff]
    %v637 = vld [vmem:[#allocation11 + $0x30] sm:$0xff]
    %v638 = vld [vmem:[#allocation11 + $0x38] sm:$0xff]
    %v639 = vld [vmem:[#allocation11 + $0x40] sm:$0xff]
    %v640 = vld [vmem:[#allocation11 + $0x48] sm:$0xff]
    %v641 = vld [vmem:[#allocation11 + $0x50] sm:$0xff]
    %v642 = vld [vmem:[#allocation11 + $0x58] sm:$0xff]
    %v643 = vld [vmem:[#allocation11 + $0x60] sm:$0xff]
    %v644 = vld [vmem:[#allocation11 + $0x68] sm:$0xff]
    %v645 = vld [vmem:[#allocation11 + $0x70] sm:$0xff]
    %v646 = vld [vmem:[#allocation11 + $0x78] sm:$0xff]
    %v647 = vmax.f32 %v631, 0.0
    %v648 = vmax.f32 %v632, 0.0
    %v649 = vmax.f32 %v633, 0.0
    %v650 = vmax.f32 %v634, 0.0
    %v651 = vmax.f32 %v635, 0.0
    %v652 = vmax.f32 %v636, 0.0
    %v653 = vmax.f32 %v637, 0.0
    %v654 = vmax.f32 %v638, 0.0
    %v655 = vmax.f32 %v639, 0.0
    %v656 = vmax.f32 %v640, 0.0
    %v657 = vmax.f32 %v641, 0.0
    %v658 = vmax.f32 %v642, 0.0
    %v659 = vmax.f32 %v643, 0.0
    %v660 = vmax.f32 %v644, 0.0
    %v661 = vmax.f32 %v645, 0.0
    %v662 = vmax.f32 %v646, 0.0
    %v663 = vand.u32 2147483647, %v631
    %v664 = vand.u32 2147483647, %v632
    %v665 = vand.u32 2147483647, %v633
    %v666 = vand.u32 2147483647, %v634
    %v667 = vand.u32 2147483647, %v635
    %v668 = vand.u32 2147483647, %v636
    %v669 = vand.u32 2147483647, %v637
    %v670 = vand.u32 2147483647, %v638
    %v671 = vand.u32 2147483647, %v639
    %v672 = vand.u32 2147483647, %v640
    %v673 = vand.u32 2147483647, %v641
    %v674 = vand.u32 2147483647, %v642
    %v675 = vand.u32 2147483647, %v643
    %v676 = vand.u32 2147483647, %v644
    %v677 = vand.u32 2147483647, %v645
    %v678 = vand.u32 2147483647, %v646
    %v679 = vsub.f32 0.0, %v663
    %v680 = vsub.f32 0.0, %v664
    %v681 = vsub.f32 0.0, %v665
    %v682 = vsub.f32 0.0, %v666
    %v683 = vsub.f32 0.0, %v667
    %v684 = vsub.f32 0.0, %v668
    %v685 = vsub.f32 0.0, %v669
    %v686 = vsub.f32 0.0, %v670
    %v687 = vsub.f32 0.0, %v671
    %v688 = vsub.f32 0.0, %v672
    %v689 = vsub.f32 0.0, %v673
    %v690 = vsub.f32 0.0, %v674
    %v691 = vsub.f32 0.0, %v675
    %v692 = vsub.f32 0.0, %v676
    %v693 = vsub.f32 0.0, %v677
    %v694 = vsub.f32 0.0, %v678
    %v695 = vmul.f32 %v679, 1.442695
    %v696 = vpow.pop %v695
    %v697 = vmul.f32 %v680, 1.442695
    %v698 = vpow.pop %v697
    %v699 = vmul.f32 %v681, 1.442695
    %v700 = vpow.pop %v699
    %v701 = vmul.f32 %v682, 1.442695
    %v702 = vpow.pop %v701
    %v703 = vmul.f32 %v683, 1.442695
    %v704 = vpow.pop %v703
    %v705 = vmul.f32 %v684, 1.442695
    %v706 = vpow.pop %v705
    %v707 = vmul.f32 %v685, 1.442695
    %v708 = vpow.pop %v707
    %v709 = vmul.f32 %v686, 1.442695
    %v710 = vpow.pop %v709
    %v711 = vmul.f32 %v687, 1.442695
    %v712 = vpow.pop %v711
    %v713 = vmul.f32 %v688, 1.442695
    %v714 = vpow.pop %v713
    %v715 = vmul.f32 %v689, 1.442695
    %v716 = vpow.pop %v715
    %v717 = vmul.f32 %v690, 1.442695
    %v718 = vpow.pop %v717
    %v719 = vmul.f32 %v691, 1.442695
    %v720 = vpow.pop %v719
    %v721 = vmul.f32 %v692, 1.442695
    %v722 = vpow.pop %v721
    %v723 = vmul.f32 %v693, 1.442695
    %v724 = vpow.pop %v723
    %v725 = vmul.f32 %v694, 1.442695
    %v726 = vpow.pop %v725
    %v727 = vadd.f32 %v696, 1.0
    %v728 = vlog2.pop %v727
    %v729 = vmul.f32 %v728, 0.6931472
    %v730 = vmul.f32 -0.5, %v696
    %v731 = vadd.f32 %v730, 1.0
    %v732 = vmul.f32 %v731, %v696
    %v733 = vand.u32 2147483647, %v696
    %vm734 = vcmp.lt.f32.partialorder %v733, 0.0004427343
    %v735 = vsel %vm734, %v732, %v729
    %v736 = vadd.f32 %v698, 1.0
    %v737 = vlog2.pop %v736
    %v738 = vmul.f32 %v737, 0.6931472
    %v739 = vmul.f32 -0.5, %v698
    %v740 = vadd.f32 %v739, 1.0
    %v741 = vmul.f32 %v740, %v698
    %v742 = vand.u32 2147483647, %v698
    %vm743 = vcmp.lt.f32.partialorder %v742, 0.0004427343
    %v744 = vsel %vm743, %v741, %v738
    %v745 = vadd.f32 %v700, 1.0
    %v746 = vlog2.pop %v745
    %v747 = vmul.f32 %v746, 0.6931472
    %v748 = vmul.f32 -0.5, %v700
    %v749 = vadd.f32 %v748, 1.0
    %v750 = vmul.f32 %v749, %v700
    %v751 = vand.u32 2147483647, %v700
    %vm752 = vcmp.lt.f32.partialorder %v751, 0.0004427343
    %v753 = vsel %vm752, %v750, %v747
    %v754 = vadd.f32 %v702, 1.0
    %v755 = vlog2.pop %v754
    %v756 = vmul.f32 %v755, 0.6931472
    %v757 = vmul.f32 -0.5, %v702
    %v758 = vadd.f32 %v757, 1.0
    %v759 = vmul.f32 %v758, %v702
    %v760 = vand.u32 2147483647, %v702
    %vm761 = vcmp.lt.f32.partialorder %v760, 0.0004427343
    %v762 = vsel %vm761, %v759, %v756
    %v763 = vadd.f32 %v704, 1.0
    %v764 = vlog2.pop %v763
    %v765 = vmul.f32 %v764, 0.6931472
    %v766 = vmul.f32 -0.5, %v704
    %v767 = vadd.f32 %v766, 1.0
    %v768 = vmul.f32 %v767, %v704
    %v769 = vand.u32 2147483647, %v704
    %vm770 = vcmp.lt.f32.partialorder %v769, 0.0004427343
    %v771 = vsel %vm770, %v768, %v765
    %v772 = vadd.f32 %v706, 1.0
    %v773 = vlog2.pop %v772
    %v774 = vmul.f32 %v773, 0.6931472
    %v775 = vmul.f32 -0.5, %v706
    %v776 = vadd.f32 %v775, 1.0
    %v777 = vmul.f32 %v776, %v706
    %v778 = vand.u32 2147483647, %v706
    %vm779 = vcmp.lt.f32.partialorder %v778, 0.0004427343
    %v780 = vsel %vm779, %v777, %v774
    %v781 = vadd.f32 %v708, 1.0
    %v782 = vlog2.pop %v781
    %v783 = vmul.f32 %v782, 0.6931472
    %v784 = vmul.f32 -0.5, %v708
    %v785 = vadd.f32 %v784, 1.0
    %v786 = vmul.f32 %v785, %v708
    %v787 = vand.u32 2147483647, %v708
    %vm788 = vcmp.lt.f32.partialorder %v787, 0.0004427343
    %v789 = vsel %vm788, %v786, %v783
    %v790 = vadd.f32 %v710, 1.0
    %v791 = vlog2.pop %v790
    %v792 = vmul.f32 %v791, 0.6931472
    %v793 = vmul.f32 -0.5, %v710
    %v794 = vadd.f32 %v793, 1.0
    %v795 = vmul.f32 %v794, %v710
    %v796 = vand.u32 2147483647, %v710
    %vm797 = vcmp.lt.f32.partialorder %v796, 0.0004427343
    %v798 = vsel %vm797, %v795, %v792
    %v799 = vadd.f32 %v712, 1.0
    %v800 = vlog2.pop %v799
    %v801 = vmul.f32 %v800, 0.6931472
    %v802 = vmul.f32 -0.5, %v712
    %v803 = vadd.f32 %v802, 1.0
    %v804 = vmul.f32 %v803, %v712
    %v805 = vand.u32 2147483647, %v712
    %vm806 = vcmp.lt.f32.partialorder %v805, 0.0004427343
    %v807 = vsel %vm806, %v804, %v801
    %v808 = vadd.f32 %v714, 1.0
    %v809 = vlog2.pop %v808
    %v810 = vmul.f32 %v809, 0.6931472
    %v811 = vmul.f32 -0.5, %v714
    %v812 = vadd.f32 %v811, 1.0
    %v813 = vmul.f32 %v812, %v714
    %v814 = vand.u32 2147483647, %v714
    %vm815 = vcmp.lt.f32.partialorder %v814, 0.0004427343
    %v816 = vsel %vm815, %v813, %v810
    %v817 = vadd.f32 %v716, 1.0
    %v818 = vlog2.pop %v817
    %v819 = vmul.f32 %v818, 0.6931472
    %v820 = vmul.f32 -0.5, %v716
    %v821 = vadd.f32 %v820, 1.0
    %v822 = vmul.f32 %v821, %v716
    %v823 = vand.u32 2147483647, %v716
    %vm824 = vcmp.lt.f32.partialorder %v823, 0.0004427343
    %v825 = vsel %vm824, %v822, %v819
    %v826 = vadd.f32 %v718, 1.0
    %v827 = vlog2.pop %v826
    %v828 = vmul.f32 %v827, 0.6931472
    %v829 = vmul.f32 -0.5, %v718
    %v830 = vadd.f32 %v829, 1.0
    %v831 = vmul.f32 %v830, %v718
    %v832 = vand.u32 2147483647, %v718
    %vm833 = vcmp.lt.f32.partialorder %v832, 0.0004427343
    %v834 = vsel %vm833, %v831, %v828
    %v835 = vadd.f32 %v720, 1.0
    %v836 = vlog2.pop %v835
    %v837 = vmul.f32 %v836, 0.6931472
    %v838 = vmul.f32 -0.5, %v720
    %v839 = vadd.f32 %v838, 1.0
    %v840 = vmul.f32 %v839, %v720
    %v841 = vand.u32 2147483647, %v720
    %vm842 = vcmp.lt.f32.partialorder %v841, 0.0004427343
    %v843 = vsel %vm842, %v840, %v837
    %v844 = vadd.f32 %v722, 1.0
    %v845 = vlog2.pop %v844
    %v846 = vmul.f32 %v845, 0.6931472
    %v847 = vmul.f32 -0.5, %v722
    %v848 = vadd.f32 %v847, 1.0
    %v849 = vmul.f32 %v848, %v722
    %v850 = vand.u32 2147483647, %v722
    %vm851 = vcmp.lt.f32.partialorder %v850, 0.0004427343
    %v852 = vsel %vm851, %v849, %v846
    %v853 = vadd.f32 %v724, 1.0
    %v854 = vlog2.pop %v853
    %v855 = vmul.f32 %v854, 0.6931472
    %v856 = vmul.f32 -0.5, %v724
    %v857 = vadd.f32 %v856, 1.0
    %v858 = vmul.f32 %v857, %v724
    %v859 = vand.u32 2147483647, %v724
    %vm860 = vcmp.lt.f32.partialorder %v859, 0.0004427343
    %v861 = vsel %vm860, %v858, %v855
    %v862 = vadd.f32 %v726, 1.0
    %v863 = vlog2.pop %v862
    %v864 = vmul.f32 %v863, 0.6931472
    %v865 = vmul.f32 -0.5, %v726
    %v866 = vadd.f32 %v865, 1.0
    %v867 = vmul.f32 %v866, %v726
    %v868 = vand.u32 2147483647, %v726
    %vm869 = vcmp.lt.f32.partialorder %v868, 0.0004427343
    %v870 = vsel %vm869, %v867, %v864
    %v871 = vadd.f32 %v647, %v735
    %v872 = vadd.f32 %v648, %v744
    %v873 = vadd.f32 %v649, %v753
    %v874 = vadd.f32 %v650, %v762
    %v875 = vadd.f32 %v651, %v771
    %v876 = vadd.f32 %v652, %v780
    %v877 = vadd.f32 %v653, %v789
    %v878 = vadd.f32 %v654, %v798
    %v879 = vadd.f32 %v655, %v807
    %v880 = vadd.f32 %v656, %v816
    %v881 = vadd.f32 %v657, %v825
    %v882 = vadd.f32 %v658, %v834
    %v883 = vadd.f32 %v659, %v843
    %v884 = vadd.f32 %v660, %v852
    %v885 = vadd.f32 %v661, %v861
    %v886 = vadd.f32 %v662, %v870
    %v887 = vld [vmem:[#allocation13] sm:$0xff]
    %v888 = vld [vmem:[#allocation13 + $0x8] sm:$0xff]
    %v889 = vld [vmem:[#allocation13 + $0x10] sm:$0xff]
    %v890 = vld [vmem:[#allocation13 + $0x18] sm:$0xff]
    %v891 = vld [vmem:[#allocation13 + $0x20] sm:$0xff]
    %v892 = vld [vmem:[#allocation13 + $0x28] sm:$0xff]
    %v893 = vld [vmem:[#allocation13 + $0x30] sm:$0xff]
    %v894 = vld [vmem:[#allocation13 + $0x38] sm:$0xff]
    %v895 = vld [vmem:[#allocation13 + $0x40] sm:$0xff]
    %v896 = vld [vmem:[#allocation13 + $0x48] sm:$0xff]
    %v897 = vld [vmem:[#allocation13 + $0x50] sm:$0xff]
    %v898 = vld [vmem:[#allocation13 + $0x58] sm:$0xff]
    %v899 = vld [vmem:[#allocation13 + $0x60] sm:$0xff]
    %v900 = vld [vmem:[#allocation13 + $0x68] sm:$0xff]
    %v901 = vld [vmem:[#allocation13 + $0x70] sm:$0xff]
    %v902 = vld [vmem:[#allocation13 + $0x78] sm:$0xff]
    %v903 = vmul.f32 %v871, %v887
    %v904 = vmul.f32 %v872, %v888
    %v905 = vmul.f32 %v873, %v889
    %v906 = vmul.f32 %v874, %v890
    %v907 = vmul.f32 %v875, %v891
    %v908 = vmul.f32 %v876, %v892
    %v909 = vmul.f32 %v877, %v893
    %v910 = vmul.f32 %v878, %v894
    %v911 = vmul.f32 %v879, %v895
    %v912 = vmul.f32 %v880, %v896
    %v913 = vmul.f32 %v881, %v897
    %v914 = vmul.f32 %v882, %v898
    %v915 = vmul.f32 %v883, %v899
    %v916 = vmul.f32 %v884, %v900
    %v917 = vmul.f32 %v885, %v901
    %v918 = vmul.f32 %v886, %v902
    %v919 = vadd.f32 %v615, %v903
    %v920 = vadd.f32 %v616, %v904
    %v921 = vadd.f32 %v617, %v905
    %v922 = vadd.f32 %v618, %v906
    %v923 = vadd.f32 %v619, %v907
    %v924 = vadd.f32 %v620, %v908
    %v925 = vadd.f32 %v621, %v909
    %v926 = vadd.f32 %v622, %v910
    %v927 = vadd.f32 %v623, %v911
    %v928 = vadd.f32 %v624, %v912
    %v929 = vadd.f32 %v625, %v913
    %v930 = vadd.f32 %v626, %v914
    %v931 = vadd.f32 %v627, %v915
    %v932 = vadd.f32 %v628, %v916
    %v933 = vadd.f32 %v629, %v917
    %v934 = vadd.f32 %v630, %v918
    %v935 = vld [vmem:[%s10] sm:$0x1]
    %v936 = vld [vmem:[%s11] sm:$0x1]
    %v937 = vmax.f32 %v936, 0.0
    %v938 = vand.u32 2147483647, %v936
    %v939 = vsub.f32 0.0, %v938
    %v940 = vmul.f32 %v939, 1.442695
    %v941 = vpow.pop %v940
    %v942 = vadd.f32 %v941, 1.0
    %v943 = vlog2.pop %v942
    %v944 = vmul.f32 %v943, 0.6931472
    %v945 = vmul.f32 -0.5, %v941
    %v946 = vadd.f32 %v945, 1.0
    %v947 = vmul.f32 %v946, %v941
    %v948 = vand.u32 2147483647, %v941
    %vm949 = vcmp.lt.f32.partialorder %v948, 0.0004427343
    %v950 = vsel %vm949, %v947, %v944
    %v951 = vadd.f32 %v937, %v950
    %v952 = vld [vmem:[%s12] sm:$0x1]
    %v953 = vmul.f32 %v951, %v952
    %v954 = vadd.f32 %v935, %v953
    %v956 = vlaneseq
    %v957 = vshrl.u32 %v956, 7
    %v958 = vsub.s32 0, %v957
    %v959 = vrot.slane %v954, %v958
    %961 = vmatprep.subr.mxu0 0.0
    %962 = vmatpush1.msra.mxu0 %v919
    %963 = vmatprep.subr.mxu0 0.0
    %964 = vmatpush1.msra.mxu0 %v920
    %965 = vmatprep.subr.mxu0 0.0
    %966 = vmatpush1.msra.mxu0 %v921
    %967 = vmatprep.subr.mxu0 0.0
    %968 = vmatpush1.msra.mxu0 %v922
    %969 = vmatprep.subr.mxu0 0.0
    %970 = vmatpush1.msra.mxu0 %v923
    %971 = vmatprep.subr.mxu0 0.0
    %972 = vmatpush1.msra.mxu0 %v924
    %973 = vmatprep.subr.mxu0 0.0
    %974 = vmatpush1.msra.mxu0 %v925
    %975 = vmatprep.subr.mxu0 0.0
    %976 = vmatpush1.msra.mxu0 %v926
    %977 = vmatprep.subr.mxu0 0.0
    %978 = vmatpush1.msra.mxu0 %v927
    %979 = vmatprep.subr.mxu0 0.0
    %980 = vmatpush1.msra.mxu0 %v928
    %981 = vmatprep.subr.mxu0 0.0
    %982 = vmatpush1.msra.mxu0 %v929
    %983 = vmatprep.subr.mxu0 0.0
    %984 = vmatpush1.msra.mxu0 %v930
    %985 = vmatprep.subr.mxu0 0.0
    %986 = vmatpush1.msra.mxu0 %v931
    %987 = vmatprep.subr.mxu0 0.0
    %988 = vmatpush1.msra.mxu0 %v932
    %989 = vmatprep.subr.mxu0 0.0
    %990 = vmatpush1.msra.mxu0 %v933
    %991 = vmatprep.subr.mxu0 0.0
    %992 = vmatpush1.msra.mxu0 %v934
    %993 = vmatprep.subr.mxu0 0.0
    %994 = vmatpush1.msra.mxu0 0.0
    %995 = vmatprep.subr.mxu0 0.0
    %996 = vmatpush1.msra.mxu0 0.0
    %997 = vmatprep.subr.mxu0 0.0
    %998 = vmatpush1.msra.mxu0 0.0
    %999 = vmatprep.subr.mxu0 0.0
    %1000 = vmatpush1.msra.mxu0 0.0
    %1001 = vmatprep.subr.mxu0 0.0
    %1002 = vmatpush1.msra.mxu0 0.0
    %1003 = vmatprep.subr.mxu0 0.0
    %1004 = vmatpush1.msra.mxu0 0.0
    %1005 = vmatprep.subr.mxu0 0.0
    %1006 = vmatpush1.msra.mxu0 0.0
    %1007 = vmatprep.subr.mxu0 0.0
    %1008 = vmatpush1.msra.mxu0 0.0
    %1009 = vmatprep.subr.mxu0 0.0
    %1010 = vmatpush1.msra.mxu0 0.0
    %1011 = vmatprep.subr.mxu0 0.0
    %1012 = vmatpush1.msra.mxu0 0.0
    %1013 = vmatprep.subr.mxu0 0.0
    %1014 = vmatpush1.msra.mxu0 0.0
    %1015 = vmatprep.subr.mxu0 0.0
    %1016 = vmatpush1.msra.mxu0 0.0
    %1017 = vmatprep.subr.mxu0 0.0
    %1018 = vmatpush1.msra.mxu0 0.0
    %1019 = vmatprep.subr.mxu0 0.0
    %1020 = vmatpush1.msra.mxu0 0.0
    %1021 = vmatprep.subr.mxu0 0.0
    %1022 = vmatpush1.msra.mxu0 0.0
    %1023 = vmatprep.subr.mxu0 0.0
    %1024 = vmatpush1.msra.mxu0 0.0
    %1025 = vmatprep.mubr.f32.mxu0 0.0
    %1026 = vmatmul.mubr.f32.gmra.mrb[0].mxu0 %v614
    %v1027 = vpop.f32.mrb[0].mxu0
    %v1028 = vadd.f32 %v959, %v1027
    %v1029 = vpop.f32.mrb[0].mxu0
    %1030 = vdwg.mxu0
    %v1031 = vmax.f32 %v1028, 0.0
    %v1032 = vld [vmem:[#allocation14] sm:$0xff]
    %v1033 = vld [vmem:[#allocation14 + $0x8] sm:$0xff]
    %v1034 = vld [vmem:[#allocation14 + $0x10] sm:$0xff]
    %v1035 = vld [vmem:[#allocation14 + $0x18] sm:$0xff]
    %v1036 = vld [vmem:[#allocation14 + $0x20] sm:$0xff]
    %v1037 = vld [vmem:[#allocation14 + $0x28] sm:$0xff]
    %v1038 = vld [vmem:[#allocation14 + $0x30] sm:$0xff]
    %v1039 = vld [vmem:[#allocation14 + $0x38] sm:$0xff]
    %v1040 = vld [vmem:[#allocation14 + $0x40] sm:$0xff]
    %v1041 = vld [vmem:[#allocation14 + $0x48] sm:$0xff]
    %v1042 = vld [vmem:[#allocation14 + $0x50] sm:$0xff]
    %v1043 = vld [vmem:[#allocation14 + $0x58] sm:$0xff]
    %v1044 = vld [vmem:[#allocation14 + $0x60] sm:$0xff]
    %v1045 = vld [vmem:[#allocation14 + $0x68] sm:$0xff]
    %v1046 = vld [vmem:[#allocation14 + $0x70] sm:$0xff]
    %v1047 = vld [vmem:[#allocation14 + $0x78] sm:$0xff]
    %v1048 = vld [vmem:[#allocation16] sm:$0xff]
    %v1049 = vld [vmem:[#allocation16 + $0x8] sm:$0xff]
    %v1050 = vld [vmem:[#allocation16 + $0x10] sm:$0xff]
    %v1051 = vld [vmem:[#allocation16 + $0x18] sm:$0xff]
    %v1052 = vld [vmem:[#allocation16 + $0x20] sm:$0xff]
    %v1053 = vld [vmem:[#allocation16 + $0x28] sm:$0xff]
    %v1054 = vld [vmem:[#allocation16 + $0x30] sm:$0xff]
    %v1055 = vld [vmem:[#allocation16 + $0x38] sm:$0xff]
    %v1056 = vld [vmem:[#allocation16 + $0x40] sm:$0xff]
    %v1057 = vld [vmem:[#allocation16 + $0x48] sm:$0xff]
    %v1058 = vld [vmem:[#allocation16 + $0x50] sm:$0xff]
    %v1059 = vld [vmem:[#allocation16 + $0x58] sm:$0xff]
    %v1060 = vld [vmem:[#allocation16 + $0x60] sm:$0xff]
    %v1061 = vld [vmem:[#allocation16 + $0x68] sm:$0xff]
    %v1062 = vld [vmem:[#allocation16 + $0x70] sm:$0xff]
    %v1063 = vld [vmem:[#allocation16 + $0x78] sm:$0xff]
    %v1064 = vmax.f32 %v1048, 0.0
    %v1065 = vmax.f32 %v1049, 0.0
    %v1066 = vmax.f32 %v1050, 0.0
    %v1067 = vmax.f32 %v1051, 0.0
    %v1068 = vmax.f32 %v1052, 0.0
    %v1069 = vmax.f32 %v1053, 0.0
    %v1070 = vmax.f32 %v1054, 0.0
    %v1071 = vmax.f32 %v1055, 0.0
    %v1072 = vmax.f32 %v1056, 0.0
    %v1073 = vmax.f32 %v1057, 0.0
    %v1074 = vmax.f32 %v1058, 0.0
    %v1075 = vmax.f32 %v1059, 0.0
    %v1076 = vmax.f32 %v1060, 0.0
    %v1077 = vmax.f32 %v1061, 0.0
    %v1078 = vmax.f32 %v1062, 0.0
    %v1079 = vmax.f32 %v1063, 0.0
    %v1080 = vand.u32 2147483647, %v1048
    %v1081 = vand.u32 2147483647, %v1049
    %v1082 = vand.u32 2147483647, %v1050
    %v1083 = vand.u32 2147483647, %v1051
    %v1084 = vand.u32 2147483647, %v1052
    %v1085 = vand.u32 2147483647, %v1053
    %v1086 = vand.u32 2147483647, %v1054
    %v1087 = vand.u32 2147483647, %v1055
    %v1088 = vand.u32 2147483647, %v1056
    %v1089 = vand.u32 2147483647, %v1057
    %v1090 = vand.u32 2147483647, %v1058
    %v1091 = vand.u32 2147483647, %v1059
    %v1092 = vand.u32 2147483647, %v1060
    %v1093 = vand.u32 2147483647, %v1061
    %v1094 = vand.u32 2147483647, %v1062
    %v1095 = vand.u32 2147483647, %v1063
    %v1096 = vsub.f32 0.0, %v1080
    %v1097 = vsub.f32 0.0, %v1081
    %v1098 = vsub.f32 0.0, %v1082
    %v1099 = vsub.f32 0.0, %v1083
    %v1100 = vsub.f32 0.0, %v1084
    %v1101 = vsub.f32 0.0, %v1085
    %v1102 = vsub.f32 0.0, %v1086
    %v1103 = vsub.f32 0.0, %v1087
    %v1104 = vsub.f32 0.0, %v1088
    %v1105 = vsub.f32 0.0, %v1089
    %v1106 = vsub.f32 0.0, %v1090
    %v1107 = vsub.f32 0.0, %v1091
    %v1108 = vsub.f32 0.0, %v1092
    %v1109 = vsub.f32 0.0, %v1093
    %v1110 = vsub.f32 0.0, %v1094
    %v1111 = vsub.f32 0.0, %v1095
    %v1112 = vmul.f32 %v1096, 1.442695
    %v1113 = vpow.pop %v1112
    %v1114 = vmul.f32 %v1097, 1.442695
    %v1115 = vpow.pop %v1114
    %v1116 = vmul.f32 %v1098, 1.442695
    %v1117 = vpow.pop %v1116
    %v1118 = vmul.f32 %v1099, 1.442695
    %v1119 = vpow.pop %v1118
    %v1120 = vmul.f32 %v1100, 1.442695
    %v1121 = vpow.pop %v1120
    %v1122 = vmul.f32 %v1101, 1.442695
    %v1123 = vpow.pop %v1122
    %v1124 = vmul.f32 %v1102, 1.442695
    %v1125 = vpow.pop %v1124
    %v1126 = vmul.f32 %v1103, 1.442695
    %v1127 = vpow.pop %v1126
    %v1128 = vmul.f32 %v1104, 1.442695
    %v1129 = vpow.pop %v1128
    %v1130 = vmul.f32 %v1105, 1.442695
    %v1131 = vpow.pop %v1130
    %v1132 = vmul.f32 %v1106, 1.442695
    %v1133 = vpow.pop %v1132
    %v1134 = vmul.f32 %v1107, 1.442695
    %v1135 = vpow.pop %v1134
    %v1136 = vmul.f32 %v1108, 1.442695
    %v1137 = vpow.pop %v1136
    %v1138 = vmul.f32 %v1109, 1.442695
    %v1139 = vpow.pop %v1138
    %v1140 = vmul.f32 %v1110, 1.442695
    %v1141 = vpow.pop %v1140
    %v1142 = vmul.f32 %v1111, 1.442695
    %v1143 = vpow.pop %v1142
    %v1144 = vadd.f32 %v1113, 1.0
    %v1145 = vlog2.pop %v1144
    %v1146 = vmul.f32 %v1145, 0.6931472
    %v1147 = vmul.f32 -0.5, %v1113
    %v1148 = vadd.f32 %v1147, 1.0
    %v1149 = vmul.f32 %v1148, %v1113
    %v1150 = vand.u32 2147483647, %v1113
    %vm1151 = vcmp.lt.f32.partialorder %v1150, 0.0004427343
    %v1152 = vsel %vm1151, %v1149, %v1146
    %v1153 = vadd.f32 %v1115, 1.0
    %v1154 = vlog2.pop %v1153
    %v1155 = vmul.f32 %v1154, 0.6931472
    %v1156 = vmul.f32 -0.5, %v1115
    %v1157 = vadd.f32 %v1156, 1.0
    %v1158 = vmul.f32 %v1157, %v1115
    %v1159 = vand.u32 2147483647, %v1115
    %vm1160 = vcmp.lt.f32.partialorder %v1159, 0.0004427343
    %v1161 = vsel %vm1160, %v1158, %v1155
    %v1162 = vadd.f32 %v1117, 1.0
    %v1163 = vlog2.pop %v1162
    %v1164 = vmul.f32 %v1163, 0.6931472
    %v1165 = vmul.f32 -0.5, %v1117
    %v1166 = vadd.f32 %v1165, 1.0
    %v1167 = vmul.f32 %v1166, %v1117
    %v1168 = vand.u32 2147483647, %v1117
    %vm1169 = vcmp.lt.f32.partialorder %v1168, 0.0004427343
    %v1170 = vsel %vm1169, %v1167, %v1164
    %v1171 = vadd.f32 %v1119, 1.0
    %v1172 = vlog2.pop %v1171
    %v1173 = vmul.f32 %v1172, 0.6931472
    %v1174 = vmul.f32 -0.5, %v1119
    %v1175 = vadd.f32 %v1174, 1.0
    %v1176 = vmul.f32 %v1175, %v1119
    %v1177 = vand.u32 2147483647, %v1119
    %vm1178 = vcmp.lt.f32.partialorder %v1177, 0.0004427343
    %v1179 = vsel %vm1178, %v1176, %v1173
    %v1180 = vadd.f32 %v1121, 1.0
    %v1181 = vlog2.pop %v1180
    %v1182 = vmul.f32 %v1181, 0.6931472
    %v1183 = vmul.f32 -0.5, %v1121
    %v1184 = vadd.f32 %v1183, 1.0
    %v1185 = vmul.f32 %v1184, %v1121
    %v1186 = vand.u32 2147483647, %v1121
    %vm1187 = vcmp.lt.f32.partialorder %v1186, 0.0004427343
    %v1188 = vsel %vm1187, %v1185, %v1182
    %v1189 = vadd.f32 %v1123, 1.0
    %v1190 = vlog2.pop %v1189
    %v1191 = vmul.f32 %v1190, 0.6931472
    %v1192 = vmul.f32 -0.5, %v1123
    %v1193 = vadd.f32 %v1192, 1.0
    %v1194 = vmul.f32 %v1193, %v1123
    %v1195 = vand.u32 2147483647, %v1123
    %vm1196 = vcmp.lt.f32.partialorder %v1195, 0.0004427343
    %v1197 = vsel %vm1196, %v1194, %v1191
    %v1198 = vadd.f32 %v1125, 1.0
    %v1199 = vlog2.pop %v1198
    %v1200 = vmul.f32 %v1199, 0.6931472
    %v1201 = vmul.f32 -0.5, %v1125
    %v1202 = vadd.f32 %v1201, 1.0
    %v1203 = vmul.f32 %v1202, %v1125
    %v1204 = vand.u32 2147483647, %v1125
    %vm1205 = vcmp.lt.f32.partialorder %v1204, 0.0004427343
    %v1206 = vsel %vm1205, %v1203, %v1200
    %v1207 = vadd.f32 %v1127, 1.0
    %v1208 = vlog2.pop %v1207
    %v1209 = vmul.f32 %v1208, 0.6931472
    %v1210 = vmul.f32 -0.5, %v1127
    %v1211 = vadd.f32 %v1210, 1.0
    %v1212 = vmul.f32 %v1211, %v1127
    %v1213 = vand.u32 2147483647, %v1127
    %vm1214 = vcmp.lt.f32.partialorder %v1213, 0.0004427343
    %v1215 = vsel %vm1214, %v1212, %v1209
    %v1216 = vadd.f32 %v1129, 1.0
    %v1217 = vlog2.pop %v1216
    %v1218 = vmul.f32 %v1217, 0.6931472
    %v1219 = vmul.f32 -0.5, %v1129
    %v1220 = vadd.f32 %v1219, 1.0
    %v1221 = vmul.f32 %v1220, %v1129
    %v1222 = vand.u32 2147483647, %v1129
    %vm1223 = vcmp.lt.f32.partialorder %v1222, 0.0004427343
    %v1224 = vsel %vm1223, %v1221, %v1218
    %v1225 = vadd.f32 %v1131, 1.0
    %v1226 = vlog2.pop %v1225
    %v1227 = vmul.f32 %v1226, 0.6931472
    %v1228 = vmul.f32 -0.5, %v1131
    %v1229 = vadd.f32 %v1228, 1.0
    %v1230 = vmul.f32 %v1229, %v1131
    %v1231 = vand.u32 2147483647, %v1131
    %vm1232 = vcmp.lt.f32.partialorder %v1231, 0.0004427343
    %v1233 = vsel %vm1232, %v1230, %v1227
    %v1234 = vadd.f32 %v1133, 1.0
    %v1235 = vlog2.pop %v1234
    %v1236 = vmul.f32 %v1235, 0.6931472
    %v1237 = vmul.f32 -0.5, %v1133
    %v1238 = vadd.f32 %v1237, 1.0
    %v1239 = vmul.f32 %v1238, %v1133
    %v1240 = vand.u32 2147483647, %v1133
    %vm1241 = vcmp.lt.f32.partialorder %v1240, 0.0004427343
    %v1242 = vsel %vm1241, %v1239, %v1236
    %v1243 = vadd.f32 %v1135, 1.0
    %v1244 = vlog2.pop %v1243
    %v1245 = vmul.f32 %v1244, 0.6931472
    %v1246 = vmul.f32 -0.5, %v1135
    %v1247 = vadd.f32 %v1246, 1.0
    %v1248 = vmul.f32 %v1247, %v1135
    %v1249 = vand.u32 2147483647, %v1135
    %vm1250 = vcmp.lt.f32.partialorder %v1249, 0.0004427343
    %v1251 = vsel %vm1250, %v1248, %v1245
    %v1252 = vadd.f32 %v1137, 1.0
    %v1253 = vlog2.pop %v1252
    %v1254 = vmul.f32 %v1253, 0.6931472
    %v1255 = vmul.f32 -0.5, %v1137
    %v1256 = vadd.f32 %v1255, 1.0
    %v1257 = vmul.f32 %v1256, %v1137
    %v1258 = vand.u32 2147483647, %v1137
    %vm1259 = vcmp.lt.f32.partialorder %v1258, 0.0004427343
    %v1260 = vsel %vm1259, %v1257, %v1254
    %v1261 = vadd.f32 %v1139, 1.0
    %v1262 = vlog2.pop %v1261
    %v1263 = vmul.f32 %v1262, 0.6931472
    %v1264 = vmul.f32 -0.5, %v1139
    %v1265 = vadd.f32 %v1264, 1.0
    %v1266 = vmul.f32 %v1265, %v1139
    %v1267 = vand.u32 2147483647, %v1139
    %vm1268 = vcmp.lt.f32.partialorder %v1267, 0.0004427343
    %v1269 = vsel %vm1268, %v1266, %v1263
    %v1270 = vadd.f32 %v1141, 1.0
    %v1271 = vlog2.pop %v1270
    %v1272 = vmul.f32 %v1271, 0.6931472
    %v1273 = vmul.f32 -0.5, %v1141
    %v1274 = vadd.f32 %v1273, 1.0
    %v1275 = vmul.f32 %v1274, %v1141
    %v1276 = vand.u32 2147483647, %v1141
    %vm1277 = vcmp.lt.f32.partialorder %v1276, 0.0004427343
    %v1278 = vsel %vm1277, %v1275, %v1272
    %v1279 = vadd.f32 %v1143, 1.0
    %v1280 = vlog2.pop %v1279
    %v1281 = vmul.f32 %v1280, 0.6931472
    %v1282 = vmul.f32 -0.5, %v1143
    %v1283 = vadd.f32 %v1282, 1.0
    %v1284 = vmul.f32 %v1283, %v1143
    %v1285 = vand.u32 2147483647, %v1143
    %vm1286 = vcmp.lt.f32.partialorder %v1285, 0.0004427343
    %v1287 = vsel %vm1286, %v1284, %v1281
    %v1288 = vadd.f32 %v1064, %v1152
    %v1289 = vadd.f32 %v1065, %v1161
    %v1290 = vadd.f32 %v1066, %v1170
    %v1291 = vadd.f32 %v1067, %v1179
    %v1292 = vadd.f32 %v1068, %v1188
    %v1293 = vadd.f32 %v1069, %v1197
    %v1294 = vadd.f32 %v1070, %v1206
    %v1295 = vadd.f32 %v1071, %v1215
    %v1296 = vadd.f32 %v1072, %v1224
    %v1297 = vadd.f32 %v1073, %v1233
    %v1298 = vadd.f32 %v1074, %v1242
    %v1299 = vadd.f32 %v1075, %v1251
    %v1300 = vadd.f32 %v1076, %v1260
    %v1301 = vadd.f32 %v1077, %v1269
    %v1302 = vadd.f32 %v1078, %v1278
    %v1303 = vadd.f32 %v1079, %v1287
    %v1304 = vld [vmem:[#allocation17] sm:$0xff]
    %v1305 = vld [vmem:[#allocation17 + $0x8] sm:$0xff]
    %v1306 = vld [vmem:[#allocation17 + $0x10] sm:$0xff]
    %v1307 = vld [vmem:[#allocation17 + $0x18] sm:$0xff]
    %v1308 = vld [vmem:[#allocation17 + $0x20] sm:$0xff]
    %v1309 = vld [vmem:[#allocation17 + $0x28] sm:$0xff]
    %v1310 = vld [vmem:[#allocation17 + $0x30] sm:$0xff]
    %v1311 = vld [vmem:[#allocation17 + $0x38] sm:$0xff]
    %v1312 = vld [vmem:[#allocation17 + $0x40] sm:$0xff]
    %v1313 = vld [vmem:[#allocation17 + $0x48] sm:$0xff]
    %v1314 = vld [vmem:[#allocation17 + $0x50] sm:$0xff]
    %v1315 = vld [vmem:[#allocation17 + $0x58] sm:$0xff]
    %v1316 = vld [vmem:[#allocation17 + $0x60] sm:$0xff]
    %v1317 = vld [vmem:[#allocation17 + $0x68] sm:$0xff]
    %v1318 = vld [vmem:[#allocation17 + $0x70] sm:$0xff]
    %v1319 = vld [vmem:[#allocation17 + $0x78] sm:$0xff]
    %v1320 = vmul.f32 %v1288, %v1304
    %v1321 = vmul.f32 %v1289, %v1305
    %v1322 = vmul.f32 %v1290, %v1306
    %v1323 = vmul.f32 %v1291, %v1307
    %v1324 = vmul.f32 %v1292, %v1308
    %v1325 = vmul.f32 %v1293, %v1309
    %v1326 = vmul.f32 %v1294, %v1310
    %v1327 = vmul.f32 %v1295, %v1311
    %v1328 = vmul.f32 %v1296, %v1312
    %v1329 = vmul.f32 %v1297, %v1313
    %v1330 = vmul.f32 %v1298, %v1314
    %v1331 = vmul.f32 %v1299, %v1315
    %v1332 = vmul.f32 %v1300, %v1316
    %v1333 = vmul.f32 %v1301, %v1317
    %v1334 = vmul.f32 %v1302, %v1318
    %v1335 = vmul.f32 %v1303, %v1319
    %v1336 = vadd.f32 %v1032, %v1320
    %v1337 = vadd.f32 %v1033, %v1321
    %v1338 = vadd.f32 %v1034, %v1322
    %v1339 = vadd.f32 %v1035, %v1323
    %v1340 = vadd.f32 %v1036, %v1324
    %v1341 = vadd.f32 %v1037, %v1325
    %v1342 = vadd.f32 %v1038, %v1326
    %v1343 = vadd.f32 %v1039, %v1327
    %v1344 = vadd.f32 %v1040, %v1328
    %v1345 = vadd.f32 %v1041, %v1329
    %v1346 = vadd.f32 %v1042, %v1330
    %v1347 = vadd.f32 %v1043, %v1331
    %v1348 = vadd.f32 %v1044, %v1332
    %v1349 = vadd.f32 %v1045, %v1333
    %v1350 = vadd.f32 %v1046, %v1334
    %v1351 = vadd.f32 %v1047, %v1335
    %v1352 = vld [vmem:[%s16] sm:$0x1]
    %v1353 = vld [vmem:[%s17] sm:$0x1]
    %v1354 = vmax.f32 %v1353, 0.0
    %v1355 = vand.u32 2147483647, %v1353
    %v1356 = vsub.f32 0.0, %v1355
    %v1357 = vmul.f32 %v1356, 1.442695
    %v1358 = vpow.pop %v1357
    %v1359 = vadd.f32 %v1358, 1.0
    %v1360 = vlog2.pop %v1359
    %v1361 = vmul.f32 %v1360, 0.6931472
    %v1362 = vmul.f32 -0.5, %v1358
    %v1363 = vadd.f32 %v1362, 1.0
    %v1364 = vmul.f32 %v1363, %v1358
    %v1365 = vand.u32 2147483647, %v1358
    %vm1366 = vcmp.lt.f32.partialorder %v1365, 0.0004427343
    %v1367 = vsel %vm1366, %v1364, %v1361
    %v1368 = vadd.f32 %v1354, %v1367
    %v1369 = vld [vmem:[%s18] sm:$0x1]
    %v1370 = vmul.f32 %v1368, %v1369
    %v1371 = vadd.f32 %v1352, %v1370
    %v1373 = vlaneseq
    %v1374 = vshrl.u32 %v1373, 7
    %v1375 = vsub.s32 0, %v1374
    %v1376 = vrot.slane %v1371, %v1375
    %1378 = vmatprep.subr.mxu0 0.0
    %1379 = vmatpush1.msra.mxu0 %v1336
    %1380 = vmatprep.subr.mxu0 0.0
    %1381 = vmatpush1.msra.mxu0 %v1337
    %1382 = vmatprep.subr.mxu0 0.0
    %1383 = vmatpush1.msra.mxu0 %v1338
    %1384 = vmatprep.subr.mxu0 0.0
    %1385 = vmatpush1.msra.mxu0 %v1339
    %1386 = vmatprep.subr.mxu0 0.0
    %1387 = vmatpush1.msra.mxu0 %v1340
    %1388 = vmatprep.subr.mxu0 0.0
    %1389 = vmatpush1.msra.mxu0 %v1341
    %1390 = vmatprep.subr.mxu0 0.0
    %1391 = vmatpush1.msra.mxu0 %v1342
    %1392 = vmatprep.subr.mxu0 0.0
    %1393 = vmatpush1.msra.mxu0 %v1343
    %1394 = vmatprep.subr.mxu0 0.0
    %1395 = vmatpush1.msra.mxu0 %v1344
    %1396 = vmatprep.subr.mxu0 0.0
    %1397 = vmatpush1.msra.mxu0 %v1345
    %1398 = vmatprep.subr.mxu0 0.0
    %1399 = vmatpush1.msra.mxu0 %v1346
    %1400 = vmatprep.subr.mxu0 0.0
    %1401 = vmatpush1.msra.mxu0 %v1347
    %1402 = vmatprep.subr.mxu0 0.0
    %1403 = vmatpush1.msra.mxu0 %v1348
    %1404 = vmatprep.subr.mxu0 0.0
    %1405 = vmatpush1.msra.mxu0 %v1349
    %1406 = vmatprep.subr.mxu0 0.0
    %1407 = vmatpush1.msra.mxu0 %v1350
    %1408 = vmatprep.subr.mxu0 0.0
    %1409 = vmatpush1.msra.mxu0 %v1351
    %1410 = vmatprep.subr.mxu0 0.0
    %1411 = vmatpush1.msra.mxu0 0.0
    %1412 = vmatprep.subr.mxu0 0.0
    %1413 = vmatpush1.msra.mxu0 0.0
    %1414 = vmatprep.subr.mxu0 0.0
    %1415 = vmatpush1.msra.mxu0 0.0
    %1416 = vmatprep.subr.mxu0 0.0
    %1417 = vmatpush1.msra.mxu0 0.0
    %1418 = vmatprep.subr.mxu0 0.0
    %1419 = vmatpush1.msra.mxu0 0.0
    %1420 = vmatprep.subr.mxu0 0.0
    %1421 = vmatpush1.msra.mxu0 0.0
    %1422 = vmatprep.subr.mxu0 0.0
    %1423 = vmatpush1.msra.mxu0 0.0
    %1424 = vmatprep.subr.mxu0 0.0
    %1425 = vmatpush1.msra.mxu0 0.0
    %1426 = vmatprep.subr.mxu0 0.0
    %1427 = vmatpush1.msra.mxu0 0.0
    %1428 = vmatprep.subr.mxu0 0.0
    %1429 = vmatpush1.msra.mxu0 0.0
    %1430 = vmatprep.subr.mxu0 0.0
    %1431 = vmatpush1.msra.mxu0 0.0
    %1432 = vmatprep.subr.mxu0 0.0
    %1433 = vmatpush1.msra.mxu0 0.0
    %1434 = vmatprep.subr.mxu0 0.0
    %1435 = vmatpush1.msra.mxu0 0.0
    %1436 = vmatprep.subr.mxu0 0.0
    %1437 = vmatpush1.msra.mxu0 0.0
    %1438 = vmatprep.subr.mxu0 0.0
    %1439 = vmatpush1.msra.mxu0 0.0
    %1440 = vmatprep.subr.mxu0 0.0
    %1441 = vmatpush1.msra.mxu0 0.0
    %1442 = vmatprep.mubr.f32.mxu0 0.0
    %1443 = vmatmul.mubr.f32.gmra.mrb[0].mxu0 %v1031
    %v1444 = vpop.f32.mrb[0].mxu0
    %v1445 = vadd.f32 %v1376, %v1444
    %v1446 = vpop.f32.mrb[0].mxu0
    %1447 = vdwg.mxu0
    %1448 = vst [vmem:[#allocation19] sm:$0xff] %v1445
    // Predicated region
    $region118: #{tpu_custom_call.1} parent=1 // pred_check
      _
    $region119: #{tpu_custom_call.1} parent=1 // pred_check_branch
      %1450 = sbr.rel (0) target = $region121
    $region120: #{tpu_custom_call.1} parent=1 // pred_region
      %s1452 = ssub.s32 128, 128
      %1453 = vsyncadd [#allocation4], %s1452
      %s1455 = sshll.u32 [#allocation19], 4
      %s1456 = int_to_ptr.vmem [resolvable:$true] %s1455
      %1458 = dma.vmem_to_hbm [thread:$0]  %s1456, 128, %s19, [#allocation4]
    $region121: #{tpu_custom_call.1} parent=1 // pred_fallthru
      _
    // Predicated region
    $region122: #{tpu_custom_call.1} parent=1 // pred_check
      _
    $region123: #{tpu_custom_call.1} parent=1 // pred_check_branch
      %1460 = sbr.rel (0) target = $region125
    $region124: #{tpu_custom_call.1} parent=1 // pred_region
      %1461 = dma.done [#allocation4], 128
    $region125: #{tpu_custom_call.1} parent=1 // pred_fallthru
      _
    %1462 = vsyncpa [#allocation3], 1
    %1463 = vsyncpa [#allocation6], 1
    %1464 = vsyncpa [#allocation9], 1
    %1465 = vsyncpa [#allocation12], 1
    %1466 = vsyncpa [#allocation15], 1
    %1467 = vsyncpa [#allocation18], 1
    %1468 = vsyncpa [#allocation4], 1

</llo_original>
